<compile_context>
chip_gen: v6e
topology: v6e:2x2x1
jax: 0.10.0
libtpu: 0.0.40
codegen_flags: <defaults>
</compile_context>

<pallas_src>
import functools

import jax
import jax.numpy as jnp
from jax.experimental import pallas as pl
from jax.experimental.pallas import tpu as pltpu


def _round_up(n, m):
    return -(-n // m) * m


def base_model_kernel(x_ref, w1_ref, b1_ref, w2_ref, b2_ref, w3_ref, b3_ref,
                      o_ref, *, K1, K2, K3, L3, Lp1, Lp2, Lp3):
    Bt, _, Cin = x_ref.shape
    C1 = w1_ref.shape[1]
    C2 = w2_ref.shape[1]
    Cp = w3_ref.shape[1]

    x = x_ref[...]                                              # (Bt, Lin, Cin) bf16

    # ---- layer 1: in-kernel im2col (lane-concat of K1 shifted sublane windows)
    # NOTE: shifted windows are plain slices; routing the shifts through
    # pltpu.roll (XLU) is a possible further micro-opt, not needed here.
    c1 = jnp.concatenate([x[:, k:k + Lp1, :] for k in range(K1)], axis=-1)
    a1 = jnp.dot(c1.reshape(Bt * Lp1, K1 * Cin), w1_ref[...],
                 preferred_element_type=jnp.float32)
    h1 = jnp.maximum(a1 + b1_ref[...], 0.0).astype(jnp.bfloat16)
    h1 = h1.reshape(Bt, Lp1, C1)
    # dropout1 (p=0.1): identity in inference mode

    # ---- layer 2: im2col built directly in bf16 (no f32 concat + second cast)
    c2 = jnp.concatenate([h1[:, k:k + Lp2, :] for k in range(K2)], axis=-1)
    a2 = jnp.dot(c2.reshape(Bt * Lp2, K2 * C1), w2_ref[...],
                 preferred_element_type=jnp.float32)
    h2 = jnp.maximum(a2 + b2_ref[...], 0.0).astype(jnp.bfloat16)
    h2 = h2.reshape(Bt, Lp2, C2)
    # dropout2: identity

    # ---- layer 3
    c3 = jnp.concatenate([h2[:, k:k + Lp3, :] for k in range(K3)], axis=-1)
    a3 = jnp.dot(c3.reshape(Bt * Lp3, K3 * C2), w3_ref[...],
                 preferred_element_type=jnp.float32)
    h3 = jnp.maximum(a3 + b3_ref[...], 0.0).reshape(Bt, Lp3, Cp)   # f32
    # dropout3: identity
    # TODO(synk): training-mode dropout (RNG masking) not implemented; eval semantics only.

    # ---- AdaptiveMaxPool1d(1): zero padded rows (h3 >= 0 post-ReLU) and reduce.
    # Mask is (Lp3, Cp): does not scale with Bt, no -inf/int32 full-size temp.
    row = jax.lax.broadcasted_iota(jnp.int32, (Lp3, Cp), 0)
    valid = (row < L3).astype(jnp.float32)
    o_ref[...] = jnp.max(h3 * valid[None], axis=1)[None]           # (1, Bt, Cp)


def base_model_forward(x, params, *, n_components=96, num_batch_blocks=None,
                       vmem_act_budget_bytes=12 << 20):
    """x: (B, L, C_in) float32 (pre-permute PyTorch layout).

    params: [(w, b)] * 3 with w: (K, Cin, Cout), b: (1, Cout).
    Returns (B, n_components) float32.
    """
    B, L, Cin = x.shape
    (w1, b1), (w2, b2), (w3, b3) = params
    K1, K2, K3 = w1.shape[0], w2.shape[0], w3.shape[0]
    C1, C2 = w1.shape[2], w2.shape[2]
    L1 = L - K1 + 1
    L2 = L1 - K2 + 1
    L3 = L2 - K3 + 1
    assert L3 >= 1, "sequence too short for the three valid convolutions"

    # Padded lengths: multiples of 16 (bf16 sublane packing) so every
    # (Bt, L, C) <-> (Bt*L, C) reshape is layout-trivial, and long enough that
    # every shifted conv window stays in bounds (Lp_prev >= Lp + K - 1).
    # Padded rows carry finite garbage that never feeds a valid output row and
    # is zeroed out of the maxpool.
    Lp3 = _round_up(L3, 16)
    Lp2 = _round_up(max(L2, Lp3 + K3 - 1), 16)
    Lp1 = _round_up(max(L1, Lp2 + K2 - 1), 16)
    Lin = _round_up(max(L, Lp1 + K1 - 1), 8)

    Cp = _round_up(n_components, 128)        # lane-dense output block (kept at 128)

    # ---- VMEM-budgeted batch tiling (conservative per-sample working-set sum).
    per_sample = (
        2 * (2 * Lin * Cin)                  # bf16 x block, double-buffered input
        + 2 * Lp1 * K1 * Cin                 # c1 (bf16)
        + Lp1 * C1 * (4 + 2)                 # a1 f32 + h1 bf16
        + 2 * Lp2 * K2 * C1                  # c2 (bf16)
        + Lp2 * C2 * (4 + 2)                 # a2 f32 + h2 bf16
        + 2 * Lp3 * K3 * C2                  # c3 (bf16)
        + Lp3 * Cp * (4 + 4)                 # a3/h3 f32 + masked copy
    )
    if num_batch_blocks is None:
        bt_cap = max(8, min(256, (vmem_act_budget_bytes // per_sample) // 8 * 8))
        if B <= 8 and B <= bt_cap:
            num_batch_blocks = 1             # tiny batch: fold all of B into one MXU M
        else:
            nb = max(2, -(-B // bt_cap))     # >=2 steps so dual-TC chips share the grid
            num_batch_blocks = nb + (nb % 2)  # even share per TensorCore on v7x
    Bt = -(-B // num_batch_blocks)
    if num_batch_blocks > 1:
        Bt = _round_up(Bt, 8)
    num_batch_blocks = -(-B // Bt)
    Bp = num_batch_blocks * Bt

    # ---- host-side prep: zero-pad batch/length only; raw input stays ~Cin wide.
    xp = jnp.pad(x.astype(jnp.float32),
                 ((0, Bp - B), (0, Lin - L), (0, 0))).astype(jnp.bfloat16)

    # ---- weights: (K, Cin, Cout) -> (K*Cin, Cout) bf16; biases stay f32
    w1m = w1.reshape(K1 * Cin, C1).astype(jnp.bfloat16)
    w2m = w2.reshape(K2 * C1, C2).astype(jnp.bfloat16)
    w3m = jnp.pad(w3.reshape(K3 * C2, n_components),
                  ((0, 0), (0, Cp - n_components))).astype(jnp.bfloat16)
    b1m = b1.astype(jnp.float32)
    b2m = b2.astype(jnp.float32)
    b3m = jnp.pad(b3, ((0, 0), (0, Cp - n_components))).astype(jnp.float32)

    kernel = functools.partial(base_model_kernel, K1=K1, K2=K2, K3=K3,
                               L3=L3, Lp1=Lp1, Lp2=Lp2, Lp3=Lp3)

    flops = 2 * B * (L1 * K1 * Cin * C1 + L2 * K2 * C1 * C2
                     + L3 * K3 * C2 * n_components)
    bytes_accessed = (xp.size * 2 + (w1m.size + w2m.size + w3m.size) * 2
                      + (b1m.size + b2m.size + b3m.size) * 4 + Bp * Cp * 4)

    out = pl.pallas_call(
        kernel,
        out_shape=jax.ShapeDtypeStruct((num_batch_blocks, Bt, Cp), jnp.float32),
        grid_spec=pltpu.PrefetchScalarGridSpec(
            num_scalar_prefetch=0,
            grid=(num_batch_blocks,),
            in_specs=[
                pl.BlockSpec((Bt, Lin, Cin), lambda i: (i, 0, 0)),   # raw batch block
                # Resident weights/biases (constant index maps -> no per-step re-DMA).
                # pipeline_mode=pl.Buffered(1) would shave ~200 KB of double
                # buffering; skipped since the Bt budget already leaves headroom.
                pl.BlockSpec(w1m.shape, lambda i: (0, 0)),
                pl.BlockSpec(b1m.shape, lambda i: (0, 0)),
                pl.BlockSpec(w2m.shape, lambda i: (0, 0)),
                pl.BlockSpec(b2m.shape, lambda i: (0, 0)),
                pl.BlockSpec(w3m.shape, lambda i: (0, 0)),
                pl.BlockSpec(b3m.shape, lambda i: (0, 0)),
            ],
            out_specs=pl.BlockSpec((1, Bt, Cp), lambda i: (i, 0, 0)),
        ),
        compiler_params=pltpu.CompilerParams(
            dimension_semantics=("parallel",),
            vmem_limit_bytes=32 << 20,       # >= v5e scoped default, <= v7x physical
        ),
        cost_estimate=pl.CostEstimate(flops=flops, transcendentals=0,
                                      bytes_accessed=bytes_accessed),
    )(xp, w1m, b1m, w2m, b2m, w3m, b3m)

    return out.reshape(Bp, Cp)[:B, :n_components]


def init_params(key, c_in, n_components=96):
    """Deterministic PyTorch-Conv1d-style uniform init (bound = 1/sqrt(Cin*K))."""
    specs = [(c_in, 32, 24), (32, 64, 16), (64, n_components, 8)]
    params = []
    for i, (ci, co, k) in enumerate(specs):
        kw, kb = jax.random.split(jax.random.fold_in(key, i))
        bound = 1.0 / float(ci * k) ** 0.5
        w = jax.random.uniform(kw, (k, ci, co), jnp.float32, -bound, bound)
        b = jax.random.uniform(kb, (1, co), jnp.float32, -bound, bound)
        params.append((w, b))
    return params


def ref_forward(x, params):
    """Plain-JAX f32 reference of the same forward (sanity check)."""
    h = x.astype(jnp.float32)
    for (w, b) in params:
        K = w.shape[0]
        L_out = h.shape[1] - K + 1
        acc = jnp.zeros((h.shape[0], L_out, w.shape[2]), jnp.float32)
        for k in range(K):
            acc = acc + jnp.einsum("blc,co->blo", h[:, k:k + L_out, :], w[k])
        h = jnp.maximum(acc + b[None], 0.0)
    return jnp.max(h, axis=1)


if __name__ == "__main__":
    key = jax.random.PRNGKey(0)

    L, C_in = 64, 6                # input_shape = (L, C_in); x is (B, L, C_in)
    n_components = 96

    kx, kp = jax.random.split(key)
    params = init_params(kp, C_in, n_components)

    fwd = jax.jit(functools.partial(base_model_forward, n_components=n_components))

    # --- tiny batch: single grid step (whole batch folded into the MXU M dim)
    B = 2
    x = jax.random.normal(kx, (B, L, C_in), jnp.float32)
    out = jax.block_until_ready(fwd(x, params))
    assert out.shape == (B, n_components), out.shape
    ref = ref_forward(x, params)
    err = float(jnp.max(jnp.abs(out - ref)))
    # bf16 MXU operands vs f32 reference -> loosened tolerance.
    assert jnp.allclose(out, ref, atol=3e-2, rtol=3e-2), err

    # --- larger batch: exercises the multi-block grid + padded-batch path
    B2 = 20
    x2 = jax.random.normal(jax.random.fold_in(kx, 1), (B2, L, C_in), jnp.float32)
    out2 = jax.block_until_ready(fwd(x2, params))
    assert out2.shape == (B2, n_components), out2.shape
    ref2 = ref_forward(x2, params)
    err2 = float(jnp.max(jnp.abs(out2 - ref2)))
    assert jnp.allclose(out2, ref2, atol=3e-2, rtol=3e-2), err2

    print("KERNEL_OK")
</pallas_src>

<mosaic_0001>
module attributes {stable_mosaic.version = 11 : i64} {
  func.func @base_model_kernel(%arg0: i32, %arg1: memref<2x88x6xbf16, #tpu.memory_space<vmem>>, %arg2: memref<144x32xbf16, #tpu.memory_space<vmem>>, %arg3: memref<1x32xf32, #tpu.memory_space<vmem>>, %arg4: memref<512x64xbf16, #tpu.memory_space<vmem>>, %arg5: memref<1x64xf32, #tpu.memory_space<vmem>>, %arg6: memref<512x128xbf16, #tpu.memory_space<vmem>>, %arg7: memref<1x128xf32, #tpu.memory_space<vmem>>, %arg8: memref<1x2x128xf32, #tpu.memory_space<vmem>>) attributes {dimension_semantics = [#tpu.dimension_semantics<parallel>], iteration_bounds = array<i64: 1>, scalar_prefetch = 0 : i64, scratch_operands = 0 : i64, tpu.core_type = #tpu.core_type<tc>, window_params = [{transform_indices = @transform_0, window_bounds = array<i64: 2, 88, 6>}, {pipeline_mode = #tpu.pipeline_mode<synchronous>, transform_indices = @transform_1, window_bounds = array<i64: 144, 32>}, {pipeline_mode = #tpu.pipeline_mode<synchronous>, transform_indices = @transform_2, window_bounds = array<i64: 1, 32>}, {pipeline_mode = #tpu.pipeline_mode<synchronous>, transform_indices = @transform_3, window_bounds = array<i64: 512, 64>}, {pipeline_mode = #tpu.pipeline_mode<synchronous>, transform_indices = @transform_4, window_bounds = array<i64: 1, 64>}, {pipeline_mode = #tpu.pipeline_mode<synchronous>, transform_indices = @transform_5, window_bounds = array<i64: 512, 128>}, {pipeline_mode = #tpu.pipeline_mode<synchronous>, transform_indices = @transform_6, window_bounds = array<i64: 1, 128>}, {transform_indices = @transform_7, window_bounds = array<i64: 1, 2, 128>}]} {
    %c0 = arith.constant 0 : index
    %c0_0 = arith.constant 0 : index
    %c0_1 = arith.constant 0 : index
    %0 = vector.load %arg1[%c0, %c0_0, %c0_1] : memref<2x88x6xbf16, #tpu.memory_space<vmem>>, vector<2x88x6xbf16>
    %1 = vector.extract_strided_slice %0 {offsets = [0, 0, 0], sizes = [2, 64, 6], strides = [1, 1, 1]} : vector<2x88x6xbf16> to vector<2x64x6xbf16>
    %2 = vector.extract_strided_slice %0 {offsets = [0, 1, 0], sizes = [2, 64, 6], strides = [1, 1, 1]} : vector<2x88x6xbf16> to vector<2x64x6xbf16>
    %3 = vector.extract_strided_slice %0 {offsets = [0, 2, 0], sizes = [2, 64, 6], strides = [1, 1, 1]} : vector<2x88x6xbf16> to vector<2x64x6xbf16>
    %4 = vector.extract_strided_slice %0 {offsets = [0, 3, 0], sizes = [2, 64, 6], strides = [1, 1, 1]} : vector<2x88x6xbf16> to vector<2x64x6xbf16>
    %5 = vector.extract_strided_slice %0 {offsets = [0, 4, 0], sizes = [2, 64, 6], strides = [1, 1, 1]} : vector<2x88x6xbf16> to vector<2x64x6xbf16>
    %6 = vector.extract_strided_slice %0 {offsets = [0, 5, 0], sizes = [2, 64, 6], strides = [1, 1, 1]} : vector<2x88x6xbf16> to vector<2x64x6xbf16>
    %7 = vector.extract_strided_slice %0 {offsets = [0, 6, 0], sizes = [2, 64, 6], strides = [1, 1, 1]} : vector<2x88x6xbf16> to vector<2x64x6xbf16>
    %8 = vector.extract_strided_slice %0 {offsets = [0, 7, 0], sizes = [2, 64, 6], strides = [1, 1, 1]} : vector<2x88x6xbf16> to vector<2x64x6xbf16>
    %9 = vector.extract_strided_slice %0 {offsets = [0, 8, 0], sizes = [2, 64, 6], strides = [1, 1, 1]} : vector<2x88x6xbf16> to vector<2x64x6xbf16>
    %10 = vector.extract_strided_slice %0 {offsets = [0, 9, 0], sizes = [2, 64, 6], strides = [1, 1, 1]} : vector<2x88x6xbf16> to vector<2x64x6xbf16>
    %11 = vector.extract_strided_slice %0 {offsets = [0, 10, 0], sizes = [2, 64, 6], strides = [1, 1, 1]} : vector<2x88x6xbf16> to vector<2x64x6xbf16>
    %12 = vector.extract_strided_slice %0 {offsets = [0, 11, 0], sizes = [2, 64, 6], strides = [1, 1, 1]} : vector<2x88x6xbf16> to vector<2x64x6xbf16>
    %13 = vector.extract_strided_slice %0 {offsets = [0, 12, 0], sizes = [2, 64, 6], strides = [1, 1, 1]} : vector<2x88x6xbf16> to vector<2x64x6xbf16>
    %14 = vector.extract_strided_slice %0 {offsets = [0, 13, 0], sizes = [2, 64, 6], strides = [1, 1, 1]} : vector<2x88x6xbf16> to vector<2x64x6xbf16>
    %15 = vector.extract_strided_slice %0 {offsets = [0, 14, 0], sizes = [2, 64, 6], strides = [1, 1, 1]} : vector<2x88x6xbf16> to vector<2x64x6xbf16>
    %16 = vector.extract_strided_slice %0 {offsets = [0, 15, 0], sizes = [2, 64, 6], strides = [1, 1, 1]} : vector<2x88x6xbf16> to vector<2x64x6xbf16>
    %17 = vector.extract_strided_slice %0 {offsets = [0, 16, 0], sizes = [2, 64, 6], strides = [1, 1, 1]} : vector<2x88x6xbf16> to vector<2x64x6xbf16>
    %18 = vector.extract_strided_slice %0 {offsets = [0, 17, 0], sizes = [2, 64, 6], strides = [1, 1, 1]} : vector<2x88x6xbf16> to vector<2x64x6xbf16>
    %19 = vector.extract_strided_slice %0 {offsets = [0, 18, 0], sizes = [2, 64, 6], strides = [1, 1, 1]} : vector<2x88x6xbf16> to vector<2x64x6xbf16>
    %20 = vector.extract_strided_slice %0 {offsets = [0, 19, 0], sizes = [2, 64, 6], strides = [1, 1, 1]} : vector<2x88x6xbf16> to vector<2x64x6xbf16>
    %21 = vector.extract_strided_slice %0 {offsets = [0, 20, 0], sizes = [2, 64, 6], strides = [1, 1, 1]} : vector<2x88x6xbf16> to vector<2x64x6xbf16>
    %22 = vector.extract_strided_slice %0 {offsets = [0, 21, 0], sizes = [2, 64, 6], strides = [1, 1, 1]} : vector<2x88x6xbf16> to vector<2x64x6xbf16>
    %23 = vector.extract_strided_slice %0 {offsets = [0, 22, 0], sizes = [2, 64, 6], strides = [1, 1, 1]} : vector<2x88x6xbf16> to vector<2x64x6xbf16>
    %24 = vector.extract_strided_slice %0 {offsets = [0, 23, 0], sizes = [2, 64, 6], strides = [1, 1, 1]} : vector<2x88x6xbf16> to vector<2x64x6xbf16>
    %25 = tpu.concatenate %1, %2, %3, %4, %5, %6, %7, %8, %9, %10, %11, %12, %13, %14, %15, %16 in 2 : vector<2x64x6xbf16>, vector<2x64x6xbf16>, vector<2x64x6xbf16>, vector<2x64x6xbf16>, vector<2x64x6xbf16>, vector<2x64x6xbf16>, vector<2x64x6xbf16>, vector<2x64x6xbf16>, vector<2x64x6xbf16>, vector<2x64x6xbf16>, vector<2x64x6xbf16>, vector<2x64x6xbf16>, vector<2x64x6xbf16>, vector<2x64x6xbf16>, vector<2x64x6xbf16>, vector<2x64x6xbf16> -> vector<2x64x96xbf16>
    %26 = tpu.concatenate %17, %18, %19, %20, %21, %22, %23, %24 in 2 : vector<2x64x6xbf16>, vector<2x64x6xbf16>, vector<2x64x6xbf16>, vector<2x64x6xbf16>, vector<2x64x6xbf16>, vector<2x64x6xbf16>, vector<2x64x6xbf16>, vector<2x64x6xbf16> -> vector<2x64x48xbf16>
    %27 = tpu.concatenate %25, %26 in 2 : vector<2x64x96xbf16>, vector<2x64x48xbf16> -> vector<2x64x144xbf16>
    %28 = vector.shape_cast %27 : vector<2x64x144xbf16> to vector<128x144xbf16>
    %c0_2 = arith.constant 0 : index
    %c0_3 = arith.constant 0 : index
    %29 = vector.load %arg2[%c0_2, %c0_3] : memref<144x32xbf16, #tpu.memory_space<vmem>>, vector<144x32xbf16>
    %cst = arith.constant dense<0.000000e+00> : vector<128x32xf32>
    %30 = tpu.matmul %28, %29, %cst {dimension_numbers = #tpu.dot_dimension_numbers<[1], [0], [0], [1], [0, 0, 1, 1], [], []>} : vector<128x144xbf16>, vector<144x32xbf16>, vector<128x32xf32> -> vector<128x32xf32>
    %c0_4 = arith.constant 0 : index
    %c0_5 = arith.constant 0 : index
    %31 = vector.load %arg3[%c0_4, %c0_5] : memref<1x32xf32, #tpu.memory_space<vmem>>, vector<1x32xf32>
    %32 = vector.broadcast %31 : vector<1x32xf32> to vector<128x32xf32>
    %33 = arith.addf %30, %32 : vector<128x32xf32>
    %cst_6 = arith.constant 0.000000e+00 : f32
    %34 = vector.broadcast %cst_6 : f32 to vector<128x32xf32>
    %35 = arith.maximumf %33, %34 : vector<128x32xf32>
    %36 = arith.truncf %35 : vector<128x32xf32> to vector<128x32xbf16>
    %37 = vector.shape_cast %36 : vector<128x32xbf16> to vector<2x64x32xbf16>
    %38 = vector.extract_strided_slice %37 {offsets = [0, 0, 0], sizes = [2, 48, 32], strides = [1, 1, 1]} : vector<2x64x32xbf16> to vector<2x48x32xbf16>
    %39 = vector.extract_strided_slice %37 {offsets = [0, 1, 0], sizes = [2, 48, 32], strides = [1, 1, 1]} : vector<2x64x32xbf16> to vector<2x48x32xbf16>
    %40 = vector.extract_strided_slice %37 {offsets = [0, 2, 0], sizes = [2, 48, 32], strides = [1, 1, 1]} : vector<2x64x32xbf16> to vector<2x48x32xbf16>
    %41 = vector.extract_strided_slice %37 {offsets = [0, 3, 0], sizes = [2, 48, 32], strides = [1, 1, 1]} : vector<2x64x32xbf16> to vector<2x48x32xbf16>
    %42 = vector.extract_strided_slice %37 {offsets = [0, 4, 0], sizes = [2, 48, 32], strides = [1, 1, 1]} : vector<2x64x32xbf16> to vector<2x48x32xbf16>
    %43 = vector.extract_strided_slice %37 {offsets = [0, 5, 0], sizes = [2, 48, 32], strides = [1, 1, 1]} : vector<2x64x32xbf16> to vector<2x48x32xbf16>
    %44 = vector.extract_strided_slice %37 {offsets = [0, 6, 0], sizes = [2, 48, 32], strides = [1, 1, 1]} : vector<2x64x32xbf16> to vector<2x48x32xbf16>
    %45 = vector.extract_strided_slice %37 {offsets = [0, 7, 0], sizes = [2, 48, 32], strides = [1, 1, 1]} : vector<2x64x32xbf16> to vector<2x48x32xbf16>
    %46 = vector.extract_strided_slice %37 {offsets = [0, 8, 0], sizes = [2, 48, 32], strides = [1, 1, 1]} : vector<2x64x32xbf16> to vector<2x48x32xbf16>
    %47 = vector.extract_strided_slice %37 {offsets = [0, 9, 0], sizes = [2, 48, 32], strides = [1, 1, 1]} : vector<2x64x32xbf16> to vector<2x48x32xbf16>
    %48 = vector.extract_strided_slice %37 {offsets = [0, 10, 0], sizes = [2, 48, 32], strides = [1, 1, 1]} : vector<2x64x32xbf16> to vector<2x48x32xbf16>
    %49 = vector.extract_strided_slice %37 {offsets = [0, 11, 0], sizes = [2, 48, 32], strides = [1, 1, 1]} : vector<2x64x32xbf16> to vector<2x48x32xbf16>
    %50 = vector.extract_strided_slice %37 {offsets = [0, 12, 0], sizes = [2, 48, 32], strides = [1, 1, 1]} : vector<2x64x32xbf16> to vector<2x48x32xbf16>
    %51 = vector.extract_strided_slice %37 {offsets = [0, 13, 0], sizes = [2, 48, 32], strides = [1, 1, 1]} : vector<2x64x32xbf16> to vector<2x48x32xbf16>
    %52 = vector.extract_strided_slice %37 {offsets = [0, 14, 0], sizes = [2, 48, 32], strides = [1, 1, 1]} : vector<2x64x32xbf16> to vector<2x48x32xbf16>
    %53 = vector.extract_strided_slice %37 {offsets = [0, 15, 0], sizes = [2, 48, 32], strides = [1, 1, 1]} : vector<2x64x32xbf16> to vector<2x48x32xbf16>
    %54 = tpu.concatenate %38, %39, %40, %41, %42, %43, %44, %45, %46, %47, %48, %49, %50, %51, %52, %53 in 2 : vector<2x48x32xbf16>, vector<2x48x32xbf16>, vector<2x48x32xbf16>, vector<2x48x32xbf16>, vector<2x48x32xbf16>, vector<2x48x32xbf16>, vector<2x48x32xbf16>, vector<2x48x32xbf16>, vector<2x48x32xbf16>, vector<2x48x32xbf16>, vector<2x48x32xbf16>, vector<2x48x32xbf16>, vector<2x48x32xbf16>, vector<2x48x32xbf16>, vector<2x48x32xbf16>, vector<2x48x32xbf16> -> vector<2x48x512xbf16>
    %55 = vector.shape_cast %54 : vector<2x48x512xbf16> to vector<96x512xbf16>
    %c0_7 = arith.constant 0 : index
    %c0_8 = arith.constant 0 : index
    %56 = vector.load %arg4[%c0_7, %c0_8] : memref<512x64xbf16, #tpu.memory_space<vmem>>, vector<512x64xbf16>
    %cst_9 = arith.constant dense<0.000000e+00> : vector<96x64xf32>
    %57 = tpu.matmul %55, %56, %cst_9 {dimension_numbers = #tpu.dot_dimension_numbers<[1], [0], [0], [1], [0, 0, 1, 1], [], []>} : vector<96x512xbf16>, vector<512x64xbf16>, vector<96x64xf32> -> vector<96x64xf32>
    %c0_10 = arith.constant 0 : index
    %c0_11 = arith.constant 0 : index
    %58 = vector.load %arg5[%c0_10, %c0_11] : memref<1x64xf32, #tpu.memory_space<vmem>>, vector<1x64xf32>
    %59 = vector.broadcast %58 : vector<1x64xf32> to vector<96x64xf32>
    %60 = arith.addf %57, %59 : vector<96x64xf32>
    %cst_12 = arith.constant 0.000000e+00 : f32
    %61 = vector.broadcast %cst_12 : f32 to vector<96x64xf32>
    %62 = arith.maximumf %60, %61 : vector<96x64xf32>
    %63 = arith.truncf %62 : vector<96x64xf32> to vector<96x64xbf16>
    %64 = vector.shape_cast %63 : vector<96x64xbf16> to vector<2x48x64xbf16>
    %65 = vector.extract_strided_slice %64 {offsets = [0, 0, 0], sizes = [2, 32, 64], strides = [1, 1, 1]} : vector<2x48x64xbf16> to vector<2x32x64xbf16>
    %66 = vector.extract_strided_slice %64 {offsets = [0, 1, 0], sizes = [2, 32, 64], strides = [1, 1, 1]} : vector<2x48x64xbf16> to vector<2x32x64xbf16>
    %67 = vector.extract_strided_slice %64 {offsets = [0, 2, 0], sizes = [2, 32, 64], strides = [1, 1, 1]} : vector<2x48x64xbf16> to vector<2x32x64xbf16>
    %68 = vector.extract_strided_slice %64 {offsets = [0, 3, 0], sizes = [2, 32, 64], strides = [1, 1, 1]} : vector<2x48x64xbf16> to vector<2x32x64xbf16>
    %69 = vector.extract_strided_slice %64 {offsets = [0, 4, 0], sizes = [2, 32, 64], strides = [1, 1, 1]} : vector<2x48x64xbf16> to vector<2x32x64xbf16>
    %70 = vector.extract_strided_slice %64 {offsets = [0, 5, 0], sizes = [2, 32, 64], strides = [1, 1, 1]} : vector<2x48x64xbf16> to vector<2x32x64xbf16>
    %71 = vector.extract_strided_slice %64 {offsets = [0, 6, 0], sizes = [2, 32, 64], strides = [1, 1, 1]} : vector<2x48x64xbf16> to vector<2x32x64xbf16>
    %72 = vector.extract_strided_slice %64 {offsets = [0, 7, 0], sizes = [2, 32, 64], strides = [1, 1, 1]} : vector<2x48x64xbf16> to vector<2x32x64xbf16>
    %73 = tpu.concatenate %65, %66, %67, %68, %69, %70, %71, %72 in 2 : vector<2x32x64xbf16>, vector<2x32x64xbf16>, vector<2x32x64xbf16>, vector<2x32x64xbf16>, vector<2x32x64xbf16>, vector<2x32x64xbf16>, vector<2x32x64xbf16>, vector<2x32x64xbf16> -> vector<2x32x512xbf16>
    %74 = vector.shape_cast %73 : vector<2x32x512xbf16> to vector<64x512xbf16>
    %c0_13 = arith.constant 0 : index
    %c0_14 = arith.constant 0 : index
    %75 = vector.load %arg6[%c0_13, %c0_14] : memref<512x128xbf16, #tpu.memory_space<vmem>>, vector<512x128xbf16>
    %cst_15 = arith.constant dense<0.000000e+00> : vector<64x128xf32>
    %76 = tpu.matmul %74, %75, %cst_15 {dimension_numbers = #tpu.dot_dimension_numbers<[1], [0], [0], [1], [0, 0, 1, 1], [], []>} : vector<64x512xbf16>, vector<512x128xbf16>, vector<64x128xf32> -> vector<64x128xf32>
    %c0_16 = arith.constant 0 : index
    %c0_17 = arith.constant 0 : index
    %77 = vector.load %arg7[%c0_16, %c0_17] : memref<1x128xf32, #tpu.memory_space<vmem>>, vector<1x128xf32>
    %78 = vector.broadcast %77 : vector<1x128xf32> to vector<64x128xf32>
    %79 = arith.addf %76, %78 : vector<64x128xf32>
    %cst_18 = arith.constant 0.000000e+00 : f32
    %80 = vector.broadcast %cst_18 : f32 to vector<64x128xf32>
    %81 = arith.maximumf %79, %80 : vector<64x128xf32>
    %82 = vector.shape_cast %81 : vector<64x128xf32> to vector<2x32x128xf32>
    %83 = tpu.iota {dimensions = array<i32: 0>} : vector<32x128xi32>
    %c19_i32 = arith.constant 19 : i32
    %84 = vector.broadcast %c19_i32 : i32 to vector<32x128xi32>
    %85 = arith.cmpi slt, %83, %84 : vector<32x128xi32>
    %86 = arith.extui %85 : vector<32x128xi1> to vector<32x128xi32>
    %87 = arith.sitofp %86 : vector<32x128xi32> to vector<32x128xf32>
    %88 = vector.shape_cast %87 : vector<32x128xf32> to vector<1x32x128xf32>
    %89 = vector.broadcast %88 : vector<1x32x128xf32> to vector<2x32x128xf32>
    %90 = arith.mulf %82, %89 : vector<2x32x128xf32>
    %cst_19 = arith.constant dense<0xFF800000> : vector<2x128xf32>
    %91 = vector.multi_reduction <maximumf>, %90, %cst_19 [1] : vector<2x32x128xf32> to vector<2x128xf32>
    %92 = vector.shape_cast %91 : vector<2x128xf32> to vector<1x2x128xf32>
    %c0_20 = arith.constant 0 : index
    %c0_21 = arith.constant 0 : index
    %c0_22 = arith.constant 0 : index
    %93 = vector.load %arg8[%c0_20, %c0_21, %c0_22] : memref<1x2x128xf32, #tpu.memory_space<vmem>>, vector<1x2x128xf32>
    tpu.vector_store %arg8[%c0_20, %c0_21, %c0_22], %92 {strides = array<i32>} : memref<1x2x128xf32, #tpu.memory_space<vmem>>, vector<1x2x128xf32>,
    return
  }
  func.func @transform_0(%arg0: i32) -> (i32, i32, i32) {
    %c0_i32 = arith.constant 0 : i32
    %c0_i32_0 = arith.constant 0 : i32
    %c0_i32_1 = arith.constant 0 : i32
    return %arg0, %c0_i32, %c0_i32_0 : i32, i32, i32
  }
  func.func @transform_1(%arg0: i32) -> (i32, i32) {
    %c0_i32 = arith.constant 0 : i32
    %c0_i32_0 = arith.constant 0 : i32
    %c0_i32_1 = arith.constant 0 : i32
    return %c0_i32, %c0_i32_0 : i32, i32
  }
  func.func @transform_2(%arg0: i32) -> (i32, i32) {
    %c0_i32 = arith.constant 0 : i32
    %c0_i32_0 = arith.constant 0 : i32
    %c0_i32_1 = arith.constant 0 : i32
    return %c0_i32, %c0_i32_0 : i32, i32
  }
  func.func @transform_3(%arg0: i32) -> (i32, i32) {
    %c0_i32 = arith.constant 0 : i32
    %c0_i32_0 = arith.constant 0 : i32
    %c0_i32_1 = arith.constant 0 : i32
    return %c0_i32, %c0_i32_0 : i32, i32
  }
  func.func @transform_4(%arg0: i32) -> (i32, i32) {
    %c0_i32 = arith.constant 0 : i32
    %c0_i32_0 = arith.constant 0 : i32
    %c0_i32_1 = arith.constant 0 : i32
    return %c0_i32, %c0_i32_0 : i32, i32
  }
  func.func @transform_5(%arg0: i32) -> (i32, i32) {
    %c0_i32 = arith.constant 0 : i32
    %c0_i32_0 = arith.constant 0 : i32
    %c0_i32_1 = arith.constant 0 : i32
    return %c0_i32, %c0_i32_0 : i32, i32
  }
  func.func @transform_6(%arg0: i32) -> (i32, i32) {
    %c0_i32 = arith.constant 0 : i32
    %c0_i32_0 = arith.constant 0 : i32
    %c0_i32_1 = arith.constant 0 : i32
    return %c0_i32, %c0_i32_0 : i32, i32
  }
  func.func @transform_7(%arg0: i32) -> (i32, i32, i32) {
    %c0_i32 = arith.constant 0 : i32
    %c0_i32_0 = arith.constant 0 : i32
    %c0_i32_1 = arith.constant 0 : i32
    return %arg0, %c0_i32, %c0_i32_0 : i32, i32, i32
  }
}

</mosaic_0001>

<llo_original>
// kernel: base_model_forward.1
$region0: #{base_model_forward.1}
  #allocation0 [shape = 'u32[]', space=smem, size = 0x4, offset = 0x4, fixed_abs, tag = 'smem constant byte address 0x4 - core index']
  #allocation1 [shape = 'u32[144,128]{1,0:T(1,128)}', space=vmem, size = 0x12000, scoped, tag = 'internal scratch']
  %s0 = inlined_call_operand.vmem [shape: bf16[2,88,6], index: 0, kind: input, shape index: {}]
  %s1 = inlined_call_operand.vmem [shape: bf16[144,32], index: 1, kind: input, shape index: {}]
  %s2 = inlined_call_operand.vmem [shape: f32[1,32], index: 2, kind: input, shape index: {}]
  %s3 = inlined_call_operand.vmem [shape: bf16[512,64], index: 3, kind: input, shape index: {}]
  %s4 = inlined_call_operand.vmem [shape: f32[1,64], index: 4, kind: input, shape index: {}]
  %s5 = inlined_call_operand.vmem [shape: bf16[512,128], index: 5, kind: input, shape index: {}]
  %s6 = inlined_call_operand.vmem [shape: f32[1,128], index: 6, kind: input, shape index: {}]
  %s7 = inlined_call_operand.hbm [shape: f32[1,2,128], index: 7, kind: output, shape index: {}]
  %s8 = sld [smem:[#allocation0]]
  $region38: #{base_model_forward.1} parent=0
    _
  %s10 = ssub.s32 1, %s8
  %s11 = scalar_select 0, %s10, %s8
  $region1: #{base_model_forward.1} parent=0
    #allocation2 [shape = 'u8[1024]{0}', space=vmem, size = 0x400, scoped, tag = 'output window, operand 0, single buffered']
    #allocation3 [shape = 's32[1]{0}', space=sflag, size = 0x4, scoped, tag = 'scoped memory for base_model_forward.1']
    %12 = vsyncpa [#allocation3], 0
    // Predicated region
    $region2: #{base_model_forward.1} parent=1 // pred_check
      _
    $region3: #{base_model_forward.1} parent=1 // pred_check_branch
      %14 = sbr.rel (0) target = $region5
    $region4: #{base_model_forward.1} parent=1 // pred_region
      _
    $region5: #{base_model_forward.1} parent=1 // pred_fallthru
      _
    // Predicated region
    $region6: #{base_model_forward.1} parent=1 // pred_check
      _
    $region7: #{base_model_forward.1} parent=1 // pred_check_branch
      %16 = sbr.rel (0) target = $region9
    $region8: #{base_model_forward.1} parent=1 // pred_region
      _
    $region9: #{base_model_forward.1} parent=1 // pred_fallthru
      _
    // Predicated region
    $region10: #{base_model_forward.1} parent=1 // pred_check
      _
    $region11: #{base_model_forward.1} parent=1 // pred_check_branch
      %18 = sbr.rel (0) target = $region13
    $region12: #{base_model_forward.1} parent=1 // pred_region
      _
    $region13: #{base_model_forward.1} parent=1 // pred_fallthru
      _
    // Predicated region
    $region14: #{base_model_forward.1} parent=1 // pred_check
      _
    $region15: #{base_model_forward.1} parent=1 // pred_check_branch
      %20 = sbr.rel (0) target = $region17
    $region16: #{base_model_forward.1} parent=1 // pred_region
      _
    $region17: #{base_model_forward.1} parent=1 // pred_fallthru
      _
    // Predicated region
    $region18: #{base_model_forward.1} parent=1 // pred_check
      _
    $region19: #{base_model_forward.1} parent=1 // pred_check_branch
      %22 = sbr.rel (0) target = $region21
    $region20: #{base_model_forward.1} parent=1 // pred_region
      _
    $region21: #{base_model_forward.1} parent=1 // pred_fallthru
      _
    // Predicated region
    $region22: #{base_model_forward.1} parent=1 // pred_check
      _
    $region23: #{base_model_forward.1} parent=1 // pred_check_branch
      %24 = sbr.rel (0) target = $region25
    $region24: #{base_model_forward.1} parent=1 // pred_region
      _
    $region25: #{base_model_forward.1} parent=1 // pred_fallthru
      _
    // Predicated region
    $region26: #{base_model_forward.1} parent=1 // pred_check
      _
    $region27: #{base_model_forward.1} parent=1 // pred_check_branch
      %26 = sbr.rel (0) target = $region29
    $region28: #{base_model_forward.1} parent=1 // pred_region
      _
    $region29: #{base_model_forward.1} parent=1 // pred_fallthru
      _
    %v28 = vld [vmem:[%s0] sm:$0xf]
    %v29 = vld [vmem:[%s0 + $0x4] sm:$0xf]
    %v30 = vld [vmem:[%s0 + $0x8] sm:$0xf]
    %v31 = vld [vmem:[%s0 + $0xc] sm:$0xf]
    %v32 = vld [vmem:[%s0 + $0x10] sm:$0xf]
    %v33 = vld [vmem:[%s0 + $0x14] sm:$0xf]
    %v34 = vld [vmem:[%s0 + $0x18] sm:$0xf]
    %v35 = vld [vmem:[%s0 + $0x1c] sm:$0xf]
    %v36 = vld [vmem:[%s0 + $0x20] sm:$0xf]
    %v37 = vld [vmem:[%s0 + $0x24] sm:$0xf]
    %v38 = vld [vmem:[%s0 + $0x28] sm:$0xf]
    %v39 = vld [vmem:[%s0 + $0x2c] sm:$0xf]
    %v40 = vld [vmem:[%s0 + $0x30] sm:$0xf]
    %v41 = vld [vmem:[%s0 + $0x34] sm:$0xf]
    %v42 = vld [vmem:[%s0 + $0x38] sm:$0xf]
    %v43 = vld [vmem:[%s0 + $0x3c] sm:$0xf]
    %v44 = vld [vmem:[%s0 + $0x40] sm:$0xf]
    %v45 = vld [vmem:[%s0 + $0x44] sm:$0xf]
    %v46 = vld [vmem:[%s0 + $0x48] sm:$0xf]
    %v47 = vld [vmem:[%s0 + $0x4c] sm:$0xf]
    %v48 = vld [vmem:[%s0 + $0x50] sm:$0xf]
    %v49 = vld [vmem:[%s0 + $0x54] sm:$0xf]
    %v66 = vunpack.c.l.b16 %v28
    %v67 = vunpack.c.l.b16 %v29
    %v68 = vunpack.c.l.b16 %v30
    %v69 = vunpack.c.l.b16 %v31
    %v70 = vunpack.c.l.b16 %v32
    %v71 = vunpack.c.l.b16 %v33
    %v72 = vunpack.c.l.b16 %v34
    %v73 = vunpack.c.l.b16 %v35
    %v74 = vunpack.c.l.b16 %v39
    %v75 = vunpack.c.l.b16 %v40
    %v76 = vunpack.c.l.b16 %v41
    %v77 = vunpack.c.l.b16 %v42
    %v78 = vunpack.c.l.b16 %v43
    %v79 = vunpack.c.l.b16 %v44
    %v80 = vunpack.c.l.b16 %v45
    %v81 = vunpack.c.l.b16 %v46
    %v82 = vpack.c.b16 %v67, %v66
    %v83 = vpack.c.b16 %v69, %v68
    %v84 = vpack.c.b16 %v71, %v70
    %v85 = vpack.c.b16 %v73, %v72
    %v86 = vpack.c.b16 %v75, %v74
    %v87 = vpack.c.b16 %v77, %v76
    %v88 = vpack.c.b16 %v79, %v78
    %v89 = vpack.c.b16 %v81, %v80
    %v92 = vunpack.c.l.b16 %v36
    %v93 = vunpack.c.l.b16 %v47
    %v94 = vpack.c.b16 %v92, %v92
    %v95 = vpack.c.b16 %v93, %v93
    %vm96 = vsmask.f32 7424
    %v98 = vshrl.u32 %v82, 16
    %v100 = vshll.u32 %v82, 16
    %v102 = vrot.slane %v100, 1
    %v103 = vor.u32 %v98, %v102
    %v105 = vshll.u32 %v83, 16
    %v107 = vrot.slane %v105, 1
    %v108 = vsel %vm96, %v103, %v107
    %v109 = vshrl.u32 %v83, 16
    %v111 = vor.u32 %v109, %v107
    %v113 = vshll.u32 %v84, 16
    %v115 = vrot.slane %v113, 1
    %v116 = vsel %vm96, %v111, %v115
    %v117 = vshrl.u32 %v84, 16
    %v119 = vor.u32 %v117, %v115
    %v121 = vshll.u32 %v85, 16
    %v123 = vrot.slane %v121, 1
    %v124 = vsel %vm96, %v119, %v123
    %v125 = vshrl.u32 %v85, 16
    %v127 = vor.u32 %v125, %v123
    %v129 = vshll.u32 %v94, 16
    %v131 = vrot.slane %v129, 1
    %v132 = vsel %vm96, %v127, %v131
    %v134 = vshrl.u32 %v86, 16
    %v136 = vshll.u32 %v86, 16
    %v138 = vrot.slane %v136, 1
    %v139 = vor.u32 %v134, %v138
    %v141 = vshll.u32 %v87, 16
    %v143 = vrot.slane %v141, 1
    %v144 = vsel %vm96, %v139, %v143
    %v145 = vshrl.u32 %v87, 16
    %v147 = vor.u32 %v145, %v143
    %v149 = vshll.u32 %v88, 16
    %v151 = vrot.slane %v149, 1
    %v152 = vsel %vm96, %v147, %v151
    %v153 = vshrl.u32 %v88, 16
    %v155 = vor.u32 %v153, %v151
    %v157 = vshll.u32 %v89, 16
    %v159 = vrot.slane %v157, 1
    %v160 = vsel %vm96, %v155, %v159
    %v161 = vshrl.u32 %v89, 16
    %v163 = vor.u32 %v161, %v159
    %v165 = vshll.u32 %v95, 16
    %v167 = vrot.slane %v165, 1
    %v168 = vsel %vm96, %v163, %v167
    %169 = vrot.lane.b32.xlu0 %v108, 6
    %v170 = vpop.permute.xlu0 %169
    %171 = vrot.lane.b32.xlu0 %v116, 6
    %v172 = vpop.permute.xlu0 %171
    %173 = vrot.lane.b32.xlu0 %v124, 6
    %v174 = vpop.permute.xlu0 %173
    %175 = vrot.lane.b32.xlu0 %v132, 6
    %v176 = vpop.permute.xlu0 %175
    %177 = vrot.lane.b32.xlu0 %v144, 6
    %v178 = vpop.permute.xlu0 %177
    %179 = vrot.lane.b32.xlu0 %v152, 6
    %v180 = vpop.permute.xlu0 %179
    %181 = vrot.lane.b32.xlu0 %v160, 6
    %v182 = vpop.permute.xlu0 %181
    %183 = vrot.lane.b32.xlu0 %v168, 6
    %v184 = vpop.permute.xlu0 %183
    %vm185 = vcmask 1046528
    %v186 = vrot.slane %v82, 1
    %v187 = vrot.slane %v83, 1
    %v188 = vsel %vm185, %v186, %v187
    %v189 = vrot.slane %v84, 1
    %v190 = vsel %vm185, %v187, %v189
    %v191 = vrot.slane %v85, 1
    %v192 = vsel %vm185, %v189, %v191
    %v193 = vrot.slane %v94, 1
    %v194 = vsel %vm185, %v191, %v193
    %v195 = vrot.slane %v86, 1
    %v196 = vrot.slane %v87, 1
    %v197 = vsel %vm185, %v195, %v196
    %v198 = vrot.slane %v88, 1
    %v199 = vsel %vm185, %v196, %v198
    %v200 = vrot.slane %v89, 1
    %v201 = vsel %vm185, %v198, %v200
    %v202 = vrot.slane %v95, 1
    %v203 = vsel %vm185, %v200, %v202
    %204 = vrot.lane.b32.xlu0 %v188, 12
    %v205 = vpop.permute.xlu0 %204
    %206 = vrot.lane.b32.xlu0 %v190, 12
    %v207 = vpop.permute.xlu0 %206
    %208 = vrot.lane.b32.xlu0 %v192, 12
    %v209 = vpop.permute.xlu0 %208
    %210 = vrot.lane.b32.xlu0 %v194, 12
    %v211 = vpop.permute.xlu0 %210
    %212 = vrot.lane.b32.xlu0 %v197, 12
    %v213 = vpop.permute.xlu0 %212
    %214 = vrot.lane.b32.xlu0 %v199, 12
    %v215 = vpop.permute.xlu0 %214
    %216 = vrot.lane.b32.xlu0 %v201, 12
    %v217 = vpop.permute.xlu0 %216
    %218 = vrot.lane.b32.xlu0 %v203, 12
    %v219 = vpop.permute.xlu0 %218
    %vm220 = vsmask.f32 6400
    %v221 = vrot.slane %v98, 1
    %v222 = vrot.slane %v100, 2
    %v223 = vor.u32 %v221, %v222
    %v224 = vrot.slane %v109, 1
    %v225 = vrot.slane %v105, 2
    %v226 = vor.u32 %v224, %v225
    %v227 = vsel %vm220, %v223, %v226
    %v228 = vrot.slane %v117, 1
    %v229 = vrot.slane %v113, 2
    %v230 = vor.u32 %v228, %v229
    %v231 = vsel %vm220, %v226, %v230
    %v232 = vrot.slane %v125, 1
    %v233 = vrot.slane %v121, 2
    %v234 = vor.u32 %v232, %v233
    %v235 = vsel %vm220, %v230, %v234
    %v236 = vshrl.u32 %v94, 16
    %v238 = vrot.slane %v236, 1
    %v239 = vrot.slane %v129, 2
    %v240 = vor.u32 %v238, %v239
    %v241 = vsel %vm220, %v234, %v240
    %v242 = vrot.slane %v134, 1
    %v243 = vrot.slane %v136, 2
    %v244 = vor.u32 %v242, %v243
    %v245 = vrot.slane %v145, 1
    %v246 = vrot.slane %v141, 2
    %v247 = vor.u32 %v245, %v246
    %v248 = vsel %vm220, %v244, %v247
    %v249 = vrot.slane %v153, 1
    %v250 = vrot.slane %v149, 2
    %v251 = vor.u32 %v249, %v250
    %v252 = vsel %vm220, %v247, %v251
    %v253 = vrot.slane %v161, 1
    %v254 = vrot.slane %v157, 2
    %v255 = vor.u32 %v253, %v254
    %v256 = vsel %vm220, %v251, %v255
    %v257 = vshrl.u32 %v95, 16
    %v259 = vrot.slane %v257, 1
    %v260 = vrot.slane %v165, 2
    %v261 = vor.u32 %v259, %v260
    %v262 = vsel %vm220, %v255, %v261
    %263 = vrot.lane.b32.xlu0 %v227, 18
    %v264 = vpop.permute.xlu0 %263
    %265 = vrot.lane.b32.xlu0 %v231, 18
    %v266 = vpop.permute.xlu0 %265
    %267 = vrot.lane.b32.xlu0 %v235, 18
    %v268 = vpop.permute.xlu0 %267
    %269 = vrot.lane.b32.xlu0 %v241, 18
    %v270 = vpop.permute.xlu0 %269
    %271 = vrot.lane.b32.xlu0 %v248, 18
    %v272 = vpop.permute.xlu0 %271
    %273 = vrot.lane.b32.xlu0 %v252, 18
    %v274 = vpop.permute.xlu0 %273
    %275 = vrot.lane.b32.xlu0 %v256, 18
    %v276 = vpop.permute.xlu0 %275
    %277 = vrot.lane.b32.xlu0 %v262, 18
    %v278 = vpop.permute.xlu0 %277
    %vm279 = vcmask 1045504
    %v280 = vrot.slane %v82, 2
    %v281 = vrot.slane %v83, 2
    %v282 = vsel %vm279, %v280, %v281
    %v283 = vrot.slane %v84, 2
    %v284 = vsel %vm279, %v281, %v283
    %v285 = vrot.slane %v85, 2
    %v286 = vsel %vm279, %v283, %v285
    %v287 = vrot.slane %v94, 2
    %v288 = vsel %vm279, %v285, %v287
    %v289 = vrot.slane %v86, 2
    %v290 = vrot.slane %v87, 2
    %v291 = vsel %vm279, %v289, %v290
    %v292 = vrot.slane %v88, 2
    %v293 = vsel %vm279, %v290, %v292
    %v294 = vrot.slane %v89, 2
    %v295 = vsel %vm279, %v292, %v294
    %v296 = vrot.slane %v95, 2
    %v297 = vsel %vm279, %v294, %v296
    %298 = vrot.lane.b32.xlu0 %v282, 24
    %v299 = vpop.permute.xlu0 %298
    %300 = vrot.lane.b32.xlu0 %v284, 24
    %v301 = vpop.permute.xlu0 %300
    %302 = vrot.lane.b32.xlu0 %v286, 24
    %v303 = vpop.permute.xlu0 %302
    %304 = vrot.lane.b32.xlu0 %v288, 24
    %v305 = vpop.permute.xlu0 %304
    %306 = vrot.lane.b32.xlu0 %v291, 24
    %v307 = vpop.permute.xlu0 %306
    %308 = vrot.lane.b32.xlu0 %v293, 24
    %v309 = vpop.permute.xlu0 %308
    %310 = vrot.lane.b32.xlu0 %v295, 24
    %v311 = vpop.permute.xlu0 %310
    %312 = vrot.lane.b32.xlu0 %v297, 24
    %v313 = vpop.permute.xlu0 %312
    %vm314 = vsmask.f32 5376
    %v315 = vrot.slane %v98, 2
    %v316 = vrot.slane %v100, 3
    %v317 = vor.u32 %v315, %v316
    %v318 = vrot.slane %v109, 2
    %v319 = vrot.slane %v105, 3
    %v320 = vor.u32 %v318, %v319
    %v321 = vsel %vm314, %v317, %v320
    %v322 = vrot.slane %v117, 2
    %v323 = vrot.slane %v113, 3
    %v324 = vor.u32 %v322, %v323
    %v325 = vsel %vm314, %v320, %v324
    %v326 = vrot.slane %v125, 2
    %v327 = vrot.slane %v121, 3
    %v328 = vor.u32 %v326, %v327
    %v329 = vsel %vm314, %v324, %v328
    %v330 = vrot.slane %v236, 2
    %v331 = vrot.slane %v129, 3
    %v332 = vor.u32 %v330, %v331
    %v333 = vsel %vm314, %v328, %v332
    %v334 = vrot.slane %v134, 2
    %v335 = vrot.slane %v136, 3
    %v336 = vor.u32 %v334, %v335
    %v337 = vrot.slane %v145, 2
    %v338 = vrot.slane %v141, 3
    %v339 = vor.u32 %v337, %v338
    %v340 = vsel %vm314, %v336, %v339
    %v341 = vrot.slane %v153, 2
    %v342 = vrot.slane %v149, 3
    %v343 = vor.u32 %v341, %v342
    %v344 = vsel %vm314, %v339, %v343
    %v345 = vrot.slane %v161, 2
    %v346 = vrot.slane %v157, 3
    %v347 = vor.u32 %v345, %v346
    %v348 = vsel %vm314, %v343, %v347
    %v349 = vrot.slane %v257, 2
    %v350 = vrot.slane %v165, 3
    %v351 = vor.u32 %v349, %v350
    %v352 = vsel %vm314, %v347, %v351
    %353 = vrot.lane.b32.xlu0 %v321, 30
    %v354 = vpop.permute.xlu0 %353
    %355 = vrot.lane.b32.xlu0 %v325, 30
    %v356 = vpop.permute.xlu0 %355
    %357 = vrot.lane.b32.xlu0 %v329, 30
    %v358 = vpop.permute.xlu0 %357
    %359 = vrot.lane.b32.xlu0 %v333, 30
    %v360 = vpop.permute.xlu0 %359
    %361 = vrot.lane.b32.xlu0 %v340, 30
    %v362 = vpop.permute.xlu0 %361
    %363 = vrot.lane.b32.xlu0 %v344, 30
    %v364 = vpop.permute.xlu0 %363
    %365 = vrot.lane.b32.xlu0 %v348, 30
    %v366 = vpop.permute.xlu0 %365
    %367 = vrot.lane.b32.xlu0 %v352, 30
    %v368 = vpop.permute.xlu0 %367
    %vm369 = vcmask 1044480
    %v370 = vrot.slane %v82, 3
    %v371 = vrot.slane %v83, 3
    %v372 = vsel %vm369, %v370, %v371
    %v373 = vrot.slane %v84, 3
    %v374 = vsel %vm369, %v371, %v373
    %v375 = vrot.slane %v85, 3
    %v376 = vsel %vm369, %v373, %v375
    %v377 = vrot.slane %v94, 3
    %v378 = vsel %vm369, %v375, %v377
    %v379 = vrot.slane %v86, 3
    %v380 = vrot.slane %v87, 3
    %v381 = vsel %vm369, %v379, %v380
    %v382 = vrot.slane %v88, 3
    %v383 = vsel %vm369, %v380, %v382
    %v384 = vrot.slane %v89, 3
    %v385 = vsel %vm369, %v382, %v384
    %v386 = vrot.slane %v95, 3
    %v387 = vsel %vm369, %v384, %v386
    %388 = vrot.lane.b32.xlu0 %v372, 36
    %v389 = vpop.permute.xlu0 %388
    %390 = vrot.lane.b32.xlu0 %v374, 36
    %v391 = vpop.permute.xlu0 %390
    %392 = vrot.lane.b32.xlu0 %v376, 36
    %v393 = vpop.permute.xlu0 %392
    %394 = vrot.lane.b32.xlu0 %v378, 36
    %v395 = vpop.permute.xlu0 %394
    %396 = vrot.lane.b32.xlu0 %v381, 36
    %v397 = vpop.permute.xlu0 %396
    %398 = vrot.lane.b32.xlu0 %v383, 36
    %v399 = vpop.permute.xlu0 %398
    %400 = vrot.lane.b32.xlu0 %v385, 36
    %v401 = vpop.permute.xlu0 %400
    %402 = vrot.lane.b32.xlu0 %v387, 36
    %v403 = vpop.permute.xlu0 %402
    %vm404 = vsmask.f32 4352
    %v405 = vrot.slane %v98, 3
    %v406 = vrot.slane %v100, 4
    %v407 = vor.u32 %v405, %v406
    %v408 = vrot.slane %v109, 3
    %v409 = vrot.slane %v105, 4
    %v410 = vor.u32 %v408, %v409
    %v411 = vsel %vm404, %v407, %v410
    %v412 = vrot.slane %v117, 3
    %v413 = vrot.slane %v113, 4
    %v414 = vor.u32 %v412, %v413
    %v415 = vsel %vm404, %v410, %v414
    %v416 = vrot.slane %v125, 3
    %v417 = vrot.slane %v121, 4
    %v418 = vor.u32 %v416, %v417
    %v419 = vsel %vm404, %v414, %v418
    %v420 = vrot.slane %v236, 3
    %v421 = vrot.slane %v129, 4
    %v422 = vor.u32 %v420, %v421
    %v423 = vsel %vm404, %v418, %v422
    %v424 = vrot.slane %v134, 3
    %v425 = vrot.slane %v136, 4
    %v426 = vor.u32 %v424, %v425
    %v427 = vrot.slane %v145, 3
    %v428 = vrot.slane %v141, 4
    %v429 = vor.u32 %v427, %v428
    %v430 = vsel %vm404, %v426, %v429
    %v431 = vrot.slane %v153, 3
    %v432 = vrot.slane %v149, 4
    %v433 = vor.u32 %v431, %v432
    %v434 = vsel %vm404, %v429, %v433
    %v435 = vrot.slane %v161, 3
    %v436 = vrot.slane %v157, 4
    %v437 = vor.u32 %v435, %v436
    %v438 = vsel %vm404, %v433, %v437
    %v439 = vrot.slane %v257, 3
    %v440 = vrot.slane %v165, 4
    %v441 = vor.u32 %v439, %v440
    %v442 = vsel %vm404, %v437, %v441
    %443 = vrot.lane.b32.xlu0 %v411, 42
    %v444 = vpop.permute.xlu0 %443
    %445 = vrot.lane.b32.xlu0 %v415, 42
    %v446 = vpop.permute.xlu0 %445
    %447 = vrot.lane.b32.xlu0 %v419, 42
    %v448 = vpop.permute.xlu0 %447
    %449 = vrot.lane.b32.xlu0 %v423, 42
    %v450 = vpop.permute.xlu0 %449
    %451 = vrot.lane.b32.xlu0 %v430, 42
    %v452 = vpop.permute.xlu0 %451
    %453 = vrot.lane.b32.xlu0 %v434, 42
    %v454 = vpop.permute.xlu0 %453
    %455 = vrot.lane.b32.xlu0 %v438, 42
    %v456 = vpop.permute.xlu0 %455
    %457 = vrot.lane.b32.xlu0 %v442, 42
    %v458 = vpop.permute.xlu0 %457
    %v459 = vpack.c.b16 %v68, %v67
    %v460 = vpack.c.b16 %v70, %v69
    %v461 = vpack.c.b16 %v72, %v71
    %v462 = vpack.c.b16 %v92, %v73
    %v463 = vpack.c.b16 %v76, %v75
    %v464 = vpack.c.b16 %v78, %v77
    %v465 = vpack.c.b16 %v80, %v79
    %v466 = vpack.c.b16 %v93, %v81
    %467 = vrot.lane.b32.xlu0 %v459, 48
    %v468 = vpop.permute.xlu0 %467
    %469 = vrot.lane.b32.xlu0 %v460, 48
    %v470 = vpop.permute.xlu0 %469
    %471 = vrot.lane.b32.xlu0 %v461, 48
    %v472 = vpop.permute.xlu0 %471
    %473 = vrot.lane.b32.xlu0 %v462, 48
    %v474 = vpop.permute.xlu0 %473
    %475 = vrot.lane.b32.xlu0 %v463, 48
    %v476 = vpop.permute.xlu0 %475
    %477 = vrot.lane.b32.xlu0 %v464, 48
    %v478 = vpop.permute.xlu0 %477
    %479 = vrot.lane.b32.xlu0 %v465, 48
    %v480 = vpop.permute.xlu0 %479
    %481 = vrot.lane.b32.xlu0 %v466, 48
    %v482 = vpop.permute.xlu0 %481
    %v485 = vunpack.c.l.b16 %v37
    %v486 = vunpack.c.l.b16 %v48
    %v487 = vpack.c.b16 %v485, %v485
    %v488 = vpack.c.b16 %v486, %v486
    %v490 = vshrl.u32 %v459, 16
    %v492 = vshll.u32 %v459, 16
    %v494 = vrot.slane %v492, 1
    %v495 = vor.u32 %v490, %v494
    %v497 = vshll.u32 %v460, 16
    %v499 = vrot.slane %v497, 1
    %v500 = vsel %vm96, %v495, %v499
    %v501 = vshrl.u32 %v460, 16
    %v503 = vor.u32 %v501, %v499
    %v505 = vshll.u32 %v461, 16
    %v507 = vrot.slane %v505, 1
    %v508 = vsel %vm96, %v503, %v507
    %v509 = vshrl.u32 %v461, 16
    %v511 = vor.u32 %v509, %v507
    %v513 = vshll.u32 %v462, 16
    %v515 = vrot.slane %v513, 1
    %v516 = vsel %vm96, %v511, %v515
    %v517 = vshrl.u32 %v462, 16
    %v519 = vor.u32 %v517, %v515
    %v521 = vshll.u32 %v487, 16
    %v523 = vrot.slane %v521, 1
    %v524 = vsel %vm96, %v519, %v523
    %v526 = vshrl.u32 %v463, 16
    %v528 = vshll.u32 %v463, 16
    %v530 = vrot.slane %v528, 1
    %v531 = vor.u32 %v526, %v530
    %v533 = vshll.u32 %v464, 16
    %v535 = vrot.slane %v533, 1
    %v536 = vsel %vm96, %v531, %v535
    %v537 = vshrl.u32 %v464, 16
    %v539 = vor.u32 %v537, %v535
    %v541 = vshll.u32 %v465, 16
    %v543 = vrot.slane %v541, 1
    %v544 = vsel %vm96, %v539, %v543
    %v545 = vshrl.u32 %v465, 16
    %v547 = vor.u32 %v545, %v543
    %v549 = vshll.u32 %v466, 16
    %v551 = vrot.slane %v549, 1
    %v552 = vsel %vm96, %v547, %v551
    %v553 = vshrl.u32 %v466, 16
    %v555 = vor.u32 %v553, %v551
    %v557 = vshll.u32 %v488, 16
    %v559 = vrot.slane %v557, 1
    %v560 = vsel %vm96, %v555, %v559
    %561 = vrot.lane.b32.xlu0 %v500, 54
    %v562 = vpop.permute.xlu0 %561
    %563 = vrot.lane.b32.xlu0 %v508, 54
    %v564 = vpop.permute.xlu0 %563
    %565 = vrot.lane.b32.xlu0 %v516, 54
    %v566 = vpop.permute.xlu0 %565
    %567 = vrot.lane.b32.xlu0 %v524, 54
    %v568 = vpop.permute.xlu0 %567
    %569 = vrot.lane.b32.xlu0 %v536, 54
    %v570 = vpop.permute.xlu0 %569
    %571 = vrot.lane.b32.xlu0 %v544, 54
    %v572 = vpop.permute.xlu0 %571
    %573 = vrot.lane.b32.xlu0 %v552, 54
    %v574 = vpop.permute.xlu0 %573
    %575 = vrot.lane.b32.xlu0 %v560, 54
    %v576 = vpop.permute.xlu0 %575
    %v577 = vrot.slane %v459, 1
    %v578 = vrot.slane %v460, 1
    %v579 = vsel %vm185, %v577, %v578
    %v580 = vrot.slane %v461, 1
    %v581 = vsel %vm185, %v578, %v580
    %v582 = vrot.slane %v462, 1
    %v583 = vsel %vm185, %v580, %v582
    %v584 = vrot.slane %v487, 1
    %v585 = vsel %vm185, %v582, %v584
    %v586 = vrot.slane %v463, 1
    %v587 = vrot.slane %v464, 1
    %v588 = vsel %vm185, %v586, %v587
    %v589 = vrot.slane %v465, 1
    %v590 = vsel %vm185, %v587, %v589
    %v591 = vrot.slane %v466, 1
    %v592 = vsel %vm185, %v589, %v591
    %v593 = vrot.slane %v488, 1
    %v594 = vsel %vm185, %v591, %v593
    %595 = vrot.lane.b32.xlu0 %v579, 60
    %v596 = vpop.permute.xlu0 %595
    %597 = vrot.lane.b32.xlu0 %v581, 60
    %v598 = vpop.permute.xlu0 %597
    %599 = vrot.lane.b32.xlu0 %v583, 60
    %v600 = vpop.permute.xlu0 %599
    %601 = vrot.lane.b32.xlu0 %v585, 60
    %v602 = vpop.permute.xlu0 %601
    %603 = vrot.lane.b32.xlu0 %v588, 60
    %v604 = vpop.permute.xlu0 %603
    %605 = vrot.lane.b32.xlu0 %v590, 60
    %v606 = vpop.permute.xlu0 %605
    %607 = vrot.lane.b32.xlu0 %v592, 60
    %v608 = vpop.permute.xlu0 %607
    %609 = vrot.lane.b32.xlu0 %v594, 60
    %v610 = vpop.permute.xlu0 %609
    %v611 = vrot.slane %v490, 1
    %v612 = vrot.slane %v492, 2
    %v613 = vor.u32 %v611, %v612
    %v614 = vrot.slane %v501, 1
    %v615 = vrot.slane %v497, 2
    %v616 = vor.u32 %v614, %v615
    %v617 = vsel %vm220, %v613, %v616
    %v618 = vrot.slane %v509, 1
    %v619 = vrot.slane %v505, 2
    %v620 = vor.u32 %v618, %v619
    %v621 = vsel %vm220, %v616, %v620
    %v622 = vrot.slane %v517, 1
    %v623 = vrot.slane %v513, 2
    %v624 = vor.u32 %v622, %v623
    %v625 = vsel %vm220, %v620, %v624
    %v626 = vshrl.u32 %v487, 16
    %v628 = vrot.slane %v626, 1
    %v629 = vrot.slane %v521, 2
    %v630 = vor.u32 %v628, %v629
    %v631 = vsel %vm220, %v624, %v630
    %v632 = vrot.slane %v526, 1
    %v633 = vrot.slane %v528, 2
    %v634 = vor.u32 %v632, %v633
    %v635 = vrot.slane %v537, 1
    %v636 = vrot.slane %v533, 2
    %v637 = vor.u32 %v635, %v636
    %v638 = vsel %vm220, %v634, %v637
    %v639 = vrot.slane %v545, 1
    %v640 = vrot.slane %v541, 2
    %v641 = vor.u32 %v639, %v640
    %v642 = vsel %vm220, %v637, %v641
    %v643 = vrot.slane %v553, 1
    %v644 = vrot.slane %v549, 2
    %v645 = vor.u32 %v643, %v644
    %v646 = vsel %vm220, %v641, %v645
    %v647 = vshrl.u32 %v488, 16
    %v649 = vrot.slane %v647, 1
    %v650 = vrot.slane %v557, 2
    %v651 = vor.u32 %v649, %v650
    %v652 = vsel %vm220, %v645, %v651
    %653 = vrot.lane.b32.xlu0 %v617, 66
    %v654 = vpop.permute.xlu0 %653
    %655 = vrot.lane.b32.xlu0 %v621, 66
    %v656 = vpop.permute.xlu0 %655
    %657 = vrot.lane.b32.xlu0 %v625, 66
    %v658 = vpop.permute.xlu0 %657
    %659 = vrot.lane.b32.xlu0 %v631, 66
    %v660 = vpop.permute.xlu0 %659
    %661 = vrot.lane.b32.xlu0 %v638, 66
    %v662 = vpop.permute.xlu0 %661
    %663 = vrot.lane.b32.xlu0 %v642, 66
    %v664 = vpop.permute.xlu0 %663
    %665 = vrot.lane.b32.xlu0 %v646, 66
    %v666 = vpop.permute.xlu0 %665
    %667 = vrot.lane.b32.xlu0 %v652, 66
    %v668 = vpop.permute.xlu0 %667
    %v669 = vrot.slane %v459, 2
    %v670 = vrot.slane %v460, 2
    %v671 = vsel %vm279, %v669, %v670
    %v672 = vrot.slane %v461, 2
    %v673 = vsel %vm279, %v670, %v672
    %v674 = vrot.slane %v462, 2
    %v675 = vsel %vm279, %v672, %v674
    %v676 = vrot.slane %v487, 2
    %v677 = vsel %vm279, %v674, %v676
    %v678 = vrot.slane %v463, 2
    %v679 = vrot.slane %v464, 2
    %v680 = vsel %vm279, %v678, %v679
    %v681 = vrot.slane %v465, 2
    %v682 = vsel %vm279, %v679, %v681
    %v683 = vrot.slane %v466, 2
    %v684 = vsel %vm279, %v681, %v683
    %v685 = vrot.slane %v488, 2
    %v686 = vsel %vm279, %v683, %v685
    %687 = vrot.lane.b32.xlu0 %v671, 72
    %v688 = vpop.permute.xlu0 %687
    %689 = vrot.lane.b32.xlu0 %v673, 72
    %v690 = vpop.permute.xlu0 %689
    %691 = vrot.lane.b32.xlu0 %v675, 72
    %v692 = vpop.permute.xlu0 %691
    %693 = vrot.lane.b32.xlu0 %v677, 72
    %v694 = vpop.permute.xlu0 %693
    %695 = vrot.lane.b32.xlu0 %v680, 72
    %v696 = vpop.permute.xlu0 %695
    %697 = vrot.lane.b32.xlu0 %v682, 72
    %v698 = vpop.permute.xlu0 %697
    %699 = vrot.lane.b32.xlu0 %v684, 72
    %v700 = vpop.permute.xlu0 %699
    %701 = vrot.lane.b32.xlu0 %v686, 72
    %v702 = vpop.permute.xlu0 %701
    %v703 = vrot.slane %v490, 2
    %v704 = vrot.slane %v492, 3
    %v705 = vor.u32 %v703, %v704
    %v706 = vrot.slane %v501, 2
    %v707 = vrot.slane %v497, 3
    %v708 = vor.u32 %v706, %v707
    %v709 = vsel %vm314, %v705, %v708
    %v710 = vrot.slane %v509, 2
    %v711 = vrot.slane %v505, 3
    %v712 = vor.u32 %v710, %v711
    %v713 = vsel %vm314, %v708, %v712
    %v714 = vrot.slane %v517, 2
    %v715 = vrot.slane %v513, 3
    %v716 = vor.u32 %v714, %v715
    %v717 = vsel %vm314, %v712, %v716
    %v718 = vrot.slane %v626, 2
    %v719 = vrot.slane %v521, 3
    %v720 = vor.u32 %v718, %v719
    %v721 = vsel %vm314, %v716, %v720
    %v722 = vrot.slane %v526, 2
    %v723 = vrot.slane %v528, 3
    %v724 = vor.u32 %v722, %v723
    %v725 = vrot.slane %v537, 2
    %v726 = vrot.slane %v533, 3
    %v727 = vor.u32 %v725, %v726
    %v728 = vsel %vm314, %v724, %v727
    %v729 = vrot.slane %v545, 2
    %v730 = vrot.slane %v541, 3
    %v731 = vor.u32 %v729, %v730
    %v732 = vsel %vm314, %v727, %v731
    %v733 = vrot.slane %v553, 2
    %v734 = vrot.slane %v549, 3
    %v735 = vor.u32 %v733, %v734
    %v736 = vsel %vm314, %v731, %v735
    %v737 = vrot.slane %v647, 2
    %v738 = vrot.slane %v557, 3
    %v739 = vor.u32 %v737, %v738
    %v740 = vsel %vm314, %v735, %v739
    %741 = vrot.lane.b32.xlu0 %v709, 78
    %v742 = vpop.permute.xlu0 %741
    %743 = vrot.lane.b32.xlu0 %v713, 78
    %v744 = vpop.permute.xlu0 %743
    %745 = vrot.lane.b32.xlu0 %v717, 78
    %v746 = vpop.permute.xlu0 %745
    %747 = vrot.lane.b32.xlu0 %v721, 78
    %v748 = vpop.permute.xlu0 %747
    %749 = vrot.lane.b32.xlu0 %v728, 78
    %v750 = vpop.permute.xlu0 %749
    %751 = vrot.lane.b32.xlu0 %v732, 78
    %v752 = vpop.permute.xlu0 %751
    %753 = vrot.lane.b32.xlu0 %v736, 78
    %v754 = vpop.permute.xlu0 %753
    %755 = vrot.lane.b32.xlu0 %v740, 78
    %v756 = vpop.permute.xlu0 %755
    %v757 = vrot.slane %v459, 3
    %v758 = vrot.slane %v460, 3
    %v759 = vsel %vm369, %v757, %v758
    %v760 = vrot.slane %v461, 3
    %v761 = vsel %vm369, %v758, %v760
    %v762 = vrot.slane %v462, 3
    %v763 = vsel %vm369, %v760, %v762
    %v764 = vrot.slane %v487, 3
    %v765 = vsel %vm369, %v762, %v764
    %v766 = vrot.slane %v463, 3
    %v767 = vrot.slane %v464, 3
    %v768 = vsel %vm369, %v766, %v767
    %v769 = vrot.slane %v465, 3
    %v770 = vsel %vm369, %v767, %v769
    %v771 = vrot.slane %v466, 3
    %v772 = vsel %vm369, %v769, %v771
    %v773 = vrot.slane %v488, 3
    %v774 = vsel %vm369, %v771, %v773
    %775 = vrot.lane.b32.xlu0 %v759, 84
    %v776 = vpop.permute.xlu0 %775
    %777 = vrot.lane.b32.xlu0 %v761, 84
    %v778 = vpop.permute.xlu0 %777
    %779 = vrot.lane.b32.xlu0 %v763, 84
    %v780 = vpop.permute.xlu0 %779
    %781 = vrot.lane.b32.xlu0 %v765, 84
    %v782 = vpop.permute.xlu0 %781
    %783 = vrot.lane.b32.xlu0 %v768, 84
    %v784 = vpop.permute.xlu0 %783
    %785 = vrot.lane.b32.xlu0 %v770, 84
    %v786 = vpop.permute.xlu0 %785
    %787 = vrot.lane.b32.xlu0 %v772, 84
    %v788 = vpop.permute.xlu0 %787
    %789 = vrot.lane.b32.xlu0 %v774, 84
    %v790 = vpop.permute.xlu0 %789
    %v791 = vrot.slane %v490, 3
    %v792 = vrot.slane %v492, 4
    %v793 = vor.u32 %v791, %v792
    %v794 = vrot.slane %v501, 3
    %v795 = vrot.slane %v497, 4
    %v796 = vor.u32 %v794, %v795
    %v797 = vsel %vm404, %v793, %v796
    %v798 = vrot.slane %v509, 3
    %v799 = vrot.slane %v505, 4
    %v800 = vor.u32 %v798, %v799
    %v801 = vsel %vm404, %v796, %v800
    %v802 = vrot.slane %v517, 3
    %v803 = vrot.slane %v513, 4
    %v804 = vor.u32 %v802, %v803
    %v805 = vsel %vm404, %v800, %v804
    %v806 = vrot.slane %v626, 3
    %v807 = vrot.slane %v521, 4
    %v808 = vor.u32 %v806, %v807
    %v809 = vsel %vm404, %v804, %v808
    %v810 = vrot.slane %v526, 3
    %v811 = vrot.slane %v528, 4
    %v812 = vor.u32 %v810, %v811
    %v813 = vrot.slane %v537, 3
    %v814 = vrot.slane %v533, 4
    %v815 = vor.u32 %v813, %v814
    %v816 = vsel %vm404, %v812, %v815
    %v817 = vrot.slane %v545, 3
    %v818 = vrot.slane %v541, 4
    %v819 = vor.u32 %v817, %v818
    %v820 = vsel %vm404, %v815, %v819
    %v821 = vrot.slane %v553, 3
    %v822 = vrot.slane %v549, 4
    %v823 = vor.u32 %v821, %v822
    %v824 = vsel %vm404, %v819, %v823
    %v825 = vrot.slane %v647, 3
    %v826 = vrot.slane %v557, 4
    %v827 = vor.u32 %v825, %v826
    %v828 = vsel %vm404, %v823, %v827
    %829 = vrot.lane.b32.xlu0 %v797, 90
    %v830 = vpop.permute.xlu0 %829
    %831 = vrot.lane.b32.xlu0 %v801, 90
    %v832 = vpop.permute.xlu0 %831
    %833 = vrot.lane.b32.xlu0 %v805, 90
    %v834 = vpop.permute.xlu0 %833
    %835 = vrot.lane.b32.xlu0 %v809, 90
    %v836 = vpop.permute.xlu0 %835
    %837 = vrot.lane.b32.xlu0 %v816, 90
    %v838 = vpop.permute.xlu0 %837
    %839 = vrot.lane.b32.xlu0 %v820, 90
    %v840 = vpop.permute.xlu0 %839
    %841 = vrot.lane.b32.xlu0 %v824, 90
    %v842 = vpop.permute.xlu0 %841
    %843 = vrot.lane.b32.xlu0 %v828, 90
    %v844 = vpop.permute.xlu0 %843
    %vm845 = vcmask 48128
    %v847 = vsel %vm845, %v82, %v170
    %v849 = vsel %vm845, %v83, %v172
    %v851 = vsel %vm845, %v84, %v174
    %v853 = vsel %vm845, %v85, %v176
    %v855 = vsel %vm845, %v86, %v178
    %v857 = vsel %vm845, %v87, %v180
    %v859 = vsel %vm845, %v88, %v182
    %v861 = vsel %vm845, %v89, %v184
    %vm862 = vcmask 97280
    %v864 = vsel %vm862, %v847, %v205
    %v866 = vsel %vm862, %v849, %v207
    %v868 = vsel %vm862, %v851, %v209
    %v870 = vsel %vm862, %v853, %v211
    %v872 = vsel %vm862, %v855, %v213
    %v874 = vsel %vm862, %v857, %v215
    %v876 = vsel %vm862, %v859, %v217
    %v878 = vsel %vm862, %v861, %v219
    %vm879 = vcmask 146432
    %v881 = vsel %vm879, %v864, %v264
    %v883 = vsel %vm879, %v866, %v266
    %v885 = vsel %vm879, %v868, %v268
    %v887 = vsel %vm879, %v870, %v270
    %v889 = vsel %vm879, %v872, %v272
    %v891 = vsel %vm879, %v874, %v274
    %v893 = vsel %vm879, %v876, %v276
    %v895 = vsel %vm879, %v878, %v278
    %vm896 = vcmask 195584
    %v898 = vsel %vm896, %v881, %v299
    %v900 = vsel %vm896, %v883, %v301
    %v902 = vsel %vm896, %v885, %v303
    %v904 = vsel %vm896, %v887, %v305
    %v906 = vsel %vm896, %v889, %v307
    %v908 = vsel %vm896, %v891, %v309
    %v910 = vsel %vm896, %v893, %v311
    %v912 = vsel %vm896, %v895, %v313
    %vm913 = vcmask 244736
    %v915 = vsel %vm913, %v898, %v354
    %v917 = vsel %vm913, %v900, %v356
    %v919 = vsel %vm913, %v902, %v358
    %v921 = vsel %vm913, %v904, %v360
    %v923 = vsel %vm913, %v906, %v362
    %v925 = vsel %vm913, %v908, %v364
    %v927 = vsel %vm913, %v910, %v366
    %v929 = vsel %vm913, %v912, %v368
    %vm930 = vcmask 293888
    %v932 = vsel %vm930, %v915, %v389
    %v934 = vsel %vm930, %v917, %v391
    %v936 = vsel %vm930, %v919, %v393
    %v938 = vsel %vm930, %v921, %v395
    %v940 = vsel %vm930, %v923, %v397
    %v942 = vsel %vm930, %v925, %v399
    %v944 = vsel %vm930, %v927, %v401
    %v946 = vsel %vm930, %v929, %v403
    %vm947 = vcmask 343040
    %v949 = vsel %vm947, %v932, %v444
    %v951 = vsel %vm947, %v934, %v446
    %v953 = vsel %vm947, %v936, %v448
    %v955 = vsel %vm947, %v938, %v450
    %v957 = vsel %vm947, %v940, %v452
    %v959 = vsel %vm947, %v942, %v454
    %v961 = vsel %vm947, %v944, %v456
    %v963 = vsel %vm947, %v946, %v458
    %vm964 = vcmask 392192
    %v966 = vsel %vm964, %v949, %v468
    %v968 = vsel %vm964, %v951, %v470
    %v970 = vsel %vm964, %v953, %v472
    %v972 = vsel %vm964, %v955, %v474
    %v974 = vsel %vm964, %v957, %v476
    %v976 = vsel %vm964, %v959, %v478
    %v978 = vsel %vm964, %v961, %v480
    %v980 = vsel %vm964, %v963, %v482
    %vm981 = vcmask 441344
    %v983 = vsel %vm981, %v966, %v562
    %v985 = vsel %vm981, %v968, %v564
    %v987 = vsel %vm981, %v970, %v566
    %v989 = vsel %vm981, %v972, %v568
    %v991 = vsel %vm981, %v974, %v570
    %v993 = vsel %vm981, %v976, %v572
    %v995 = vsel %vm981, %v978, %v574
    %v997 = vsel %vm981, %v980, %v576
    %vm998 = vcmask 490496
    %v1000 = vsel %vm998, %v983, %v596
    %v1002 = vsel %vm998, %v985, %v598
    %v1004 = vsel %vm998, %v987, %v600
    %v1006 = vsel %vm998, %v989, %v602
    %v1008 = vsel %vm998, %v991, %v604
    %v1010 = vsel %vm998, %v993, %v606
    %v1012 = vsel %vm998, %v995, %v608
    %v1014 = vsel %vm998, %v997, %v610
    %vm1015 = vcmask 539648
    %v1017 = vsel %vm1015, %v1000, %v654
    %v1019 = vsel %vm1015, %v1002, %v656
    %v1021 = vsel %vm1015, %v1004, %v658
    %v1023 = vsel %vm1015, %v1006, %v660
    %v1025 = vsel %vm1015, %v1008, %v662
    %v1027 = vsel %vm1015, %v1010, %v664
    %v1029 = vsel %vm1015, %v1012, %v666
    %v1031 = vsel %vm1015, %v1014, %v668
    %vm1032 = vcmask 588800
    %v1034 = vsel %vm1032, %v1017, %v688
    %v1036 = vsel %vm1032, %v1019, %v690
    %v1038 = vsel %vm1032, %v1021, %v692
    %v1040 = vsel %vm1032, %v1023, %v694
    %v1042 = vsel %vm1032, %v1025, %v696
    %v1044 = vsel %vm1032, %v1027, %v698
    %v1046 = vsel %vm1032, %v1029, %v700
    %v1048 = vsel %vm1032, %v1031, %v702
    %vm1049 = vcmask 637952
    %v1051 = vsel %vm1049, %v1034, %v742
    %v1053 = vsel %vm1049, %v1036, %v744
    %v1055 = vsel %vm1049, %v1038, %v746
    %v1057 = vsel %vm1049, %v1040, %v748
    %v1059 = vsel %vm1049, %v1042, %v750
    %v1061 = vsel %vm1049, %v1044, %v752
    %v1063 = vsel %vm1049, %v1046, %v754
    %v1065 = vsel %vm1049, %v1048, %v756
    %vm1066 = vcmask 687104
    %v1068 = vsel %vm1066, %v1051, %v776
    %v1070 = vsel %vm1066, %v1053, %v778
    %v1072 = vsel %vm1066, %v1055, %v780
    %v1074 = vsel %vm1066, %v1057, %v782
    %v1076 = vsel %vm1066, %v1059, %v784
    %v1078 = vsel %vm1066, %v1061, %v786
    %v1080 = vsel %vm1066, %v1063, %v788
    %v1082 = vsel %vm1066, %v1065, %v790
    %vm1083 = vcmask 736256
    %v1085 = vsel %vm1083, %v1068, %v830
    %v1087 = vsel %vm1083, %v1070, %v832
    %v1089 = vsel %vm1083, %v1072, %v834
    %v1091 = vsel %vm1083, %v1074, %v836
    %v1093 = vsel %vm1083, %v1076, %v838
    %v1095 = vsel %vm1083, %v1078, %v840
    %v1097 = vsel %vm1083, %v1080, %v842
    %v1099 = vsel %vm1083, %v1082, %v844
    %v1100 = vpack.c.b16 %v485, %v92
    %v1101 = vpack.c.b16 %v486, %v93
    %v1104 = vunpack.c.l.b16 %v38
    %v1105 = vunpack.c.l.b16 %v49
    %v1106 = vpack.c.b16 %v1104, %v1104
    %v1107 = vpack.c.b16 %v1105, %v1105
    %v1109 = vshll.u32 %v1100, 16
    %v1111 = vrot.slane %v1109, 1
    %v1112 = vsel %vm96, %v127, %v1111
    %v1113 = vshrl.u32 %v1100, 16
    %v1115 = vor.u32 %v1113, %v1111
    %v1117 = vshll.u32 %v1106, 16
    %v1119 = vrot.slane %v1117, 1
    %v1120 = vsel %vm96, %v1115, %v1119
    %v1122 = vshll.u32 %v1101, 16
    %v1124 = vrot.slane %v1122, 1
    %v1125 = vsel %vm96, %v163, %v1124
    %v1126 = vshrl.u32 %v1101, 16
    %v1128 = vor.u32 %v1126, %v1124
    %v1130 = vshll.u32 %v1107, 16
    %v1132 = vrot.slane %v1130, 1
    %v1133 = vsel %vm96, %v1128, %v1132
    %1134 = vrot.lane.b32.xlu0 %v1112, 6
    %v1135 = vpop.permute.xlu0 %1134
    %1136 = vrot.lane.b32.xlu0 %v1120, 6
    %v1137 = vpop.permute.xlu0 %1136
    %1138 = vrot.lane.b32.xlu0 %v1125, 6
    %v1139 = vpop.permute.xlu0 %1138
    %1140 = vrot.lane.b32.xlu0 %v1133, 6
    %v1141 = vpop.permute.xlu0 %1140
    %v1142 = vrot.slane %v1100, 1
    %v1143 = vsel %vm185, %v191, %v1142
    %v1144 = vrot.slane %v1106, 1
    %v1145 = vsel %vm185, %v1142, %v1144
    %v1146 = vrot.slane %v1101, 1
    %v1147 = vsel %vm185, %v200, %v1146
    %v1148 = vrot.slane %v1107, 1
    %v1149 = vsel %vm185, %v1146, %v1148
    %1150 = vrot.lane.b32.xlu0 %v1143, 12
    %v1151 = vpop.permute.xlu0 %1150
    %1152 = vrot.lane.b32.xlu0 %v1145, 12
    %v1153 = vpop.permute.xlu0 %1152
    %1154 = vrot.lane.b32.xlu0 %v1147, 12
    %v1155 = vpop.permute.xlu0 %1154
    %1156 = vrot.lane.b32.xlu0 %v1149, 12
    %v1157 = vpop.permute.xlu0 %1156
    %v1158 = vrot.slane %v1113, 1
    %v1159 = vrot.slane %v1109, 2
    %v1160 = vor.u32 %v1158, %v1159
    %v1161 = vsel %vm220, %v234, %v1160
    %v1162 = vshrl.u32 %v1106, 16
    %v1164 = vrot.slane %v1162, 1
    %v1165 = vrot.slane %v1117, 2
    %v1166 = vor.u32 %v1164, %v1165
    %v1167 = vsel %vm220, %v1160, %v1166
    %v1168 = vrot.slane %v1126, 1
    %v1169 = vrot.slane %v1122, 2
    %v1170 = vor.u32 %v1168, %v1169
    %v1171 = vsel %vm220, %v255, %v1170
    %v1172 = vshrl.u32 %v1107, 16
    %v1174 = vrot.slane %v1172, 1
    %v1175 = vrot.slane %v1130, 2
    %v1176 = vor.u32 %v1174, %v1175
    %v1177 = vsel %vm220, %v1170, %v1176
    %1178 = vrot.lane.b32.xlu0 %v1161, 18
    %v1179 = vpop.permute.xlu0 %1178
    %1180 = vrot.lane.b32.xlu0 %v1167, 18
    %v1181 = vpop.permute.xlu0 %1180
    %1182 = vrot.lane.b32.xlu0 %v1171, 18
    %v1183 = vpop.permute.xlu0 %1182
    %1184 = vrot.lane.b32.xlu0 %v1177, 18
    %v1185 = vpop.permute.xlu0 %1184
    %v1186 = vrot.slane %v1100, 2
    %v1187 = vsel %vm279, %v285, %v1186
    %v1188 = vrot.slane %v1106, 2
    %v1189 = vsel %vm279, %v1186, %v1188
    %v1190 = vrot.slane %v1101, 2
    %v1191 = vsel %vm279, %v294, %v1190
    %v1192 = vrot.slane %v1107, 2
    %v1193 = vsel %vm279, %v1190, %v1192
    %1194 = vrot.lane.b32.xlu0 %v1187, 24
    %v1195 = vpop.permute.xlu0 %1194
    %1196 = vrot.lane.b32.xlu0 %v1189, 24
    %v1197 = vpop.permute.xlu0 %1196
    %1198 = vrot.lane.b32.xlu0 %v1191, 24
    %v1199 = vpop.permute.xlu0 %1198
    %1200 = vrot.lane.b32.xlu0 %v1193, 24
    %v1201 = vpop.permute.xlu0 %1200
    %v1202 = vrot.slane %v1113, 2
    %v1203 = vrot.slane %v1109, 3
    %v1204 = vor.u32 %v1202, %v1203
    %v1205 = vsel %vm314, %v328, %v1204
    %v1206 = vrot.slane %v1162, 2
    %v1207 = vrot.slane %v1117, 3
    %v1208 = vor.u32 %v1206, %v1207
    %v1209 = vsel %vm314, %v1204, %v1208
    %v1210 = vrot.slane %v1126, 2
    %v1211 = vrot.slane %v1122, 3
    %v1212 = vor.u32 %v1210, %v1211
    %v1213 = vsel %vm314, %v347, %v1212
    %v1214 = vrot.slane %v1172, 2
    %v1215 = vrot.slane %v1130, 3
    %v1216 = vor.u32 %v1214, %v1215
    %v1217 = vsel %vm314, %v1212, %v1216
    %1218 = vrot.lane.b32.xlu0 %v1205, 30
    %v1219 = vpop.permute.xlu0 %1218
    %1220 = vrot.lane.b32.xlu0 %v1209, 30
    %v1221 = vpop.permute.xlu0 %1220
    %1222 = vrot.lane.b32.xlu0 %v1213, 30
    %v1223 = vpop.permute.xlu0 %1222
    %1224 = vrot.lane.b32.xlu0 %v1217, 30
    %v1225 = vpop.permute.xlu0 %1224
    %v1226 = vrot.slane %v1100, 3
    %v1227 = vsel %vm369, %v375, %v1226
    %v1228 = vrot.slane %v1106, 3
    %v1229 = vsel %vm369, %v1226, %v1228
    %v1230 = vrot.slane %v1101, 3
    %v1231 = vsel %vm369, %v384, %v1230
    %v1232 = vrot.slane %v1107, 3
    %v1233 = vsel %vm369, %v1230, %v1232
    %1234 = vrot.lane.b32.xlu0 %v1227, 36
    %v1235 = vpop.permute.xlu0 %1234
    %1236 = vrot.lane.b32.xlu0 %v1229, 36
    %v1237 = vpop.permute.xlu0 %1236
    %1238 = vrot.lane.b32.xlu0 %v1231, 36
    %v1239 = vpop.permute.xlu0 %1238
    %1240 = vrot.lane.b32.xlu0 %v1233, 36
    %v1241 = vpop.permute.xlu0 %1240
    %v1242 = vrot.slane %v1113, 3
    %v1243 = vrot.slane %v1109, 4
    %v1244 = vor.u32 %v1242, %v1243
    %v1245 = vsel %vm404, %v418, %v1244
    %v1246 = vrot.slane %v1162, 3
    %v1247 = vrot.slane %v1117, 4
    %v1248 = vor.u32 %v1246, %v1247
    %v1249 = vsel %vm404, %v1244, %v1248
    %v1250 = vrot.slane %v1126, 3
    %v1251 = vrot.slane %v1122, 4
    %v1252 = vor.u32 %v1250, %v1251
    %v1253 = vsel %vm404, %v437, %v1252
    %v1254 = vrot.slane %v1172, 3
    %v1255 = vrot.slane %v1130, 4
    %v1256 = vor.u32 %v1254, %v1255
    %v1257 = vsel %vm404, %v1252, %v1256
    %1258 = vrot.lane.b32.xlu0 %v1245, 42
    %v1259 = vpop.permute.xlu0 %1258
    %1260 = vrot.lane.b32.xlu0 %v1249, 42
    %v1261 = vpop.permute.xlu0 %1260
    %1262 = vrot.lane.b32.xlu0 %v1253, 42
    %v1263 = vpop.permute.xlu0 %1262
    %1264 = vrot.lane.b32.xlu0 %v1257, 42
    %v1265 = vpop.permute.xlu0 %1264
    %v1267 = vsel %vm845, %v85, %v1135
    %v1269 = vsel %vm845, %v1100, %v1137
    %v1271 = vsel %vm845, %v89, %v1139
    %v1273 = vsel %vm845, %v1101, %v1141
    %v1275 = vsel %vm862, %v1267, %v1151
    %v1277 = vsel %vm862, %v1269, %v1153
    %v1279 = vsel %vm862, %v1271, %v1155
    %v1281 = vsel %vm862, %v1273, %v1157
    %v1283 = vsel %vm879, %v1275, %v1179
    %v1285 = vsel %vm879, %v1277, %v1181
    %v1287 = vsel %vm879, %v1279, %v1183
    %v1289 = vsel %vm879, %v1281, %v1185
    %v1291 = vsel %vm896, %v1283, %v1195
    %v1293 = vsel %vm896, %v1285, %v1197
    %v1295 = vsel %vm896, %v1287, %v1199
    %v1297 = vsel %vm896, %v1289, %v1201
    %v1299 = vsel %vm913, %v1291, %v1219
    %v1301 = vsel %vm913, %v1293, %v1221
    %v1303 = vsel %vm913, %v1295, %v1223
    %v1305 = vsel %vm913, %v1297, %v1225
    %v1307 = vsel %vm930, %v1299, %v1235
    %v1309 = vsel %vm930, %v1301, %v1237
    %v1311 = vsel %vm930, %v1303, %v1239
    %v1313 = vsel %vm930, %v1305, %v1241
    %v1315 = vsel %vm947, %v1307, %v1259
    %v1317 = vsel %vm947, %v1309, %v1261
    %v1319 = vsel %vm947, %v1311, %v1263
    %v1321 = vsel %vm947, %v1313, %v1265
    %1330 = vrot.lane.b32.xlu0 %v951, 96
    %v1331 = vpop.permute.xlu0 %1330
    %1332 = vrot.lane.b32.xlu0 %v953, 96
    %v1333 = vpop.permute.xlu0 %1332
    %1334 = vrot.lane.b32.xlu0 %v1315, 96
    %v1335 = vpop.permute.xlu0 %1334
    %1336 = vrot.lane.b32.xlu0 %v1317, 96
    %v1337 = vpop.permute.xlu0 %1336
    %1338 = vrot.lane.b32.xlu0 %v959, 96
    %v1339 = vpop.permute.xlu0 %1338
    %1340 = vrot.lane.b32.xlu0 %v961, 96
    %v1341 = vpop.permute.xlu0 %1340
    %1342 = vrot.lane.b32.xlu0 %v1319, 96
    %v1343 = vpop.permute.xlu0 %1342
    %1344 = vrot.lane.b32.xlu0 %v1321, 96
    %v1345 = vpop.permute.xlu0 %1344
    %vm1346 = vcmask 785408
    %v1348 = vsel %vm1346, %v1085, %v1331
    %v1351 = vsel %vm1346, %v1087, %v1333
    %v1354 = vsel %vm1346, %v1089, %v1335
    %v1357 = vsel %vm1346, %v1091, %v1337
    %v1360 = vsel %vm1346, %v1093, %v1339
    %v1363 = vsel %vm1346, %v1095, %v1341
    %v1366 = vsel %vm1346, %v1097, %v1343
    %v1369 = vsel %vm1346, %v1099, %v1345
    %v1371 = vld [vmem:[%s1] sm:$0xf]
    %v1372 = vld [vmem:[%s1 + $0x4] sm:$0xf]
    %v1373 = vld [vmem:[%s1 + $0x8] sm:$0xf]
    %v1374 = vld [vmem:[%s1 + $0xc] sm:$0xf]
    %v1375 = vld [vmem:[%s1 + $0x10] sm:$0xf]
    %v1376 = vld [vmem:[%s1 + $0x14] sm:$0xf]
    %v1377 = vld [vmem:[%s1 + $0x18] sm:$0xf]
    %v1378 = vld [vmem:[%s1 + $0x1c] sm:$0xf]
    %v1379 = vld [vmem:[%s1 + $0x20] sm:$0xf]
    %v1380 = vld [vmem:[%s1 + $0x24] sm:$0xf]
    %v1381 = vld [vmem:[%s1 + $0x28] sm:$0xf]
    %v1382 = vld [vmem:[%s1 + $0x2c] sm:$0xf]
    %v1383 = vld [vmem:[%s1 + $0x30] sm:$0xf]
    %v1384 = vld [vmem:[%s1 + $0x34] sm:$0xf]
    %v1385 = vld [vmem:[%s1 + $0x38] sm:$0xf]
    %v1386 = vld [vmem:[%s1 + $0x3c] sm:$0xf]
    %v1387 = vld [vmem:[%s1 + $0x40] sm:$0xf]
    %v1388 = vld [vmem:[%s1 + $0x44] sm:$0xf]
    %v1389 = vld [vmem:[%s2] sm:$0x1]
    %v1391 = vlaneseq
    %v1392 = vshrl.u32 %v1391, 7
    %v1393 = vsub.s32 0, %v1392
    %v1394 = vrot.slane %v1389, %v1393
    %v1414 = vunpack.c.l.b16 %v1371
    %v1415 = vunpack.c.l.b16 %v1372
    %v1416 = vunpack.c.l.b16 %v1373
    %v1417 = vunpack.c.l.b16 %v1374
    %v1418 = vunpack.c.l.b16 %v1375
    %v1419 = vunpack.c.l.b16 %v1376
    %v1420 = vunpack.c.l.b16 %v1377
    %v1421 = vunpack.c.l.b16 %v1378
    %v1422 = vunpack.c.l.b16 %v1379
    %v1423 = vunpack.c.l.b16 %v1380
    %v1424 = vunpack.c.l.b16 %v1381
    %v1425 = vunpack.c.l.b16 %v1382
    %v1426 = vunpack.c.l.b16 %v1383
    %v1427 = vunpack.c.l.b16 %v1384
    %v1428 = vunpack.c.l.b16 %v1385
    %v1429 = vunpack.c.l.b16 %v1386
    %v1430 = vunpack.c.l.b16 %v1387
    %v1431 = vunpack.c.l.b16 %v1388
    %v1432 = vpack.c.b16 %v1415, %v1414
    %v1433 = vpack.c.b16 %v1417, %v1416
    %v1434 = vpack.c.b16 %v1419, %v1418
    %v1435 = vpack.c.b16 %v1421, %v1420
    %v1436 = vpack.c.b16 %v1423, %v1422
    %v1437 = vpack.c.b16 %v1425, %v1424
    %v1438 = vpack.c.b16 %v1427, %v1426
    %v1439 = vpack.c.b16 %v1429, %v1428
    %v1440 = vpack.c.b16 %v1431, %v1430
    %vm1450 = vcmask 130048
    %v1451 = vsel %vm1450, %v1331, 0
    %v1453 = vsel %vm1450, %v1333, 0
    %v1455 = vsel %vm1450, %v1335, 0
    %v1457 = vsel %vm1450, %v1337, 0
    %v1459 = vsel %vm1450, %v1339, 0
    %v1461 = vsel %vm1450, %v1341, 0
    %v1463 = vsel %vm1450, %v1343, 0
    %v1465 = vsel %vm1450, %v1345, 0
    %1467 = vmatprep.subr.bf16.mxu0 0
    %1468 = vmatpush1.bf16.msra.mxu0 %v1439
    %1469 = vmatprep.subr.bf16.mxu0 0
    %1470 = vmatpush1.bf16.msra.mxu0 %v1438
    %1471 = vmatprep.subr.bf16.mxu0 0
    %1472 = vmatpush1.bf16.msra.mxu0 %v1437
    %1473 = vmatprep.subr.bf16.mxu0 0
    %1474 = vmatpush1.bf16.msra.mxu0 %v1436
    %1475 = vmatprep.subr.bf16.mxu0 0
    %1476 = vmatpush1.bf16.msra.mxu0 %v1435
    %1477 = vmatprep.subr.bf16.mxu0 0
    %1478 = vmatpush1.bf16.msra.mxu0 %v1434
    %1479 = vmatprep.subr.bf16.mxu0 0
    %1480 = vmatpush1.bf16.msra.mxu0 %v1433
    %1481 = vmatprep.subr.bf16.mxu0 0
    %1482 = vmatpush1.bf16.msra.mxu0 %v1432
    %1483 = vmatprep.subr.bf16.mxu0 0
    %1484 = vmatpush2.bf16.msra.mxu0 0
    %1485 = vmatprep.subr.bf16.mxu0 0
    %1486 = vmatpush2.bf16.msra.mxu0 0
    %1487 = vmatprep.subr.bf16.mxu0 0
    %1488 = vmatpush2.bf16.msra.mxu0 0
    %1489 = vmatprep.subr.bf16.mxu0 0
    %1490 = vmatpush2.bf16.msra.mxu0 0
    %1491 = vmatprep.subr.bf16.mxu0 0
    %1492 = vmatpush2.bf16.msra.mxu0 0
    %1493 = vmatprep.subr.bf16.mxu0 0
    %1494 = vmatpush2.bf16.msra.mxu0 0
    %1495 = vmatprep.subr.bf16.mxu0 0
    %1496 = vmatpush2.bf16.msra.mxu0 0
    %1497 = vmatprep.subr.bf16.mxu0 0
    %1498 = vmatpush2.bf16.msra.mxu0 %v1440
    %1499 = vmatprep.mubr.bf16.mxu0 %v1451
    %1500 = vmatmul.mubr.bf16.gmra.mxu0 %v1348
    %v1501 = vpop.f32.mrf.mxu0
    %v1502 = vadd.f32 %v1394, %v1501
    %v1503 = vpop.f32.mrf.mxu0
    %v1504 = vpop.f32.mrf.mxu0
    %v1505 = vadd.f32 %v1394, %v1504
    %v1506 = vpop.f32.mrf.mxu0
    %1507 = vmatprep.mubr.bf16.mxu0 %v1453
    %1508 = vmatmul.mubr.bf16.gmra.mxu0 %v1351
    %v1509 = vpop.f32.mrf.mxu0
    %v1510 = vadd.f32 %v1394, %v1509
    %v1511 = vpop.f32.mrf.mxu0
    %v1512 = vpop.f32.mrf.mxu0
    %v1513 = vadd.f32 %v1394, %v1512
    %v1514 = vpop.f32.mrf.mxu0
    %1515 = vmatprep.mubr.bf16.mxu0 %v1455
    %1516 = vmatmul.mubr.bf16.gmra.mxu0 %v1354
    %v1517 = vpop.f32.mrf.mxu0
    %v1518 = vadd.f32 %v1394, %v1517
    %v1519 = vpop.f32.mrf.mxu0
    %v1520 = vpop.f32.mrf.mxu0
    %v1521 = vadd.f32 %v1394, %v1520
    %v1522 = vpop.f32.mrf.mxu0
    %1523 = vmatprep.mubr.bf16.mxu0 %v1457
    %1524 = vmatmul.mubr.bf16.gmra.mxu0 %v1357
    %v1525 = vpop.f32.mrf.mxu0
    %v1526 = vadd.f32 %v1394, %v1525
    %v1527 = vpop.f32.mrf.mxu0
    %v1528 = vpop.f32.mrf.mxu0
    %v1529 = vadd.f32 %v1394, %v1528
    %v1530 = vpop.f32.mrf.mxu0
    %1531 = vmatprep.mubr.bf16.mxu0 %v1459
    %1532 = vmatmul.mubr.bf16.gmra.mxu0 %v1360
    %v1533 = vpop.f32.mrf.mxu0
    %v1534 = vadd.f32 %v1394, %v1533
    %v1535 = vpop.f32.mrf.mxu0
    %v1536 = vpop.f32.mrf.mxu0
    %v1537 = vadd.f32 %v1394, %v1536
    %v1538 = vpop.f32.mrf.mxu0
    %1539 = vmatprep.mubr.bf16.mxu0 %v1461
    %1540 = vmatmul.mubr.bf16.gmra.mxu0 %v1363
    %v1541 = vpop.f32.mrf.mxu0
    %v1542 = vadd.f32 %v1394, %v1541
    %v1543 = vpop.f32.mrf.mxu0
    %v1544 = vpop.f32.mrf.mxu0
    %v1545 = vadd.f32 %v1394, %v1544
    %v1546 = vpop.f32.mrf.mxu0
    %1547 = vmatprep.mubr.bf16.mxu0 %v1463
    %1548 = vmatmul.mubr.bf16.gmra.mxu0 %v1366
    %v1549 = vpop.f32.mrf.mxu0
    %v1550 = vadd.f32 %v1394, %v1549
    %v1551 = vpop.f32.mrf.mxu0
    %v1552 = vpop.f32.mrf.mxu0
    %v1553 = vadd.f32 %v1394, %v1552
    %v1554 = vpop.f32.mrf.mxu0
    %1555 = vmatprep.mubr.bf16.mxu0 %v1465
    %1556 = vmatmul.mubr.bf16.gmra.mxu0 %v1369
    %v1557 = vpop.f32.mrf.mxu0
    %v1558 = vadd.f32 %v1394, %v1557
    %v1559 = vpop.f32.mrf.mxu0
    %v1560 = vpop.f32.mrf.mxu0
    %v1561 = vadd.f32 %v1394, %v1560
    %v1562 = vpop.f32.mrf.mxu0
    %1563 = vdwg.mxu0
    %v1564 = vmax.f32 %v1502, 0.0
    %v1565 = vmax.f32 %v1505, 0.0
    %v1566 = vmax.f32 %v1510, 0.0
    %v1567 = vmax.f32 %v1513, 0.0
    %v1568 = vmax.f32 %v1518, 0.0
    %v1569 = vmax.f32 %v1521, 0.0
    %v1570 = vmax.f32 %v1526, 0.0
    %v1571 = vmax.f32 %v1529, 0.0
    %v1572 = vmax.f32 %v1534, 0.0
    %v1573 = vmax.f32 %v1537, 0.0
    %v1574 = vmax.f32 %v1542, 0.0
    %v1575 = vmax.f32 %v1545, 0.0
    %v1576 = vmax.f32 %v1550, 0.0
    %v1577 = vmax.f32 %v1553, 0.0
    %v1578 = vmax.f32 %v1558, 0.0
    %v1579 = vmax.f32 %v1561, 0.0
    %v1580 = vpack.c.bf16 %v1565, %v1564
    %v1581 = vpack.c.bf16 %v1567, %v1566
    %v1582 = vpack.c.bf16 %v1569, %v1568
    %v1583 = vpack.c.bf16 %v1571, %v1570
    %v1584 = vpack.c.bf16 %v1573, %v1572
    %v1585 = vpack.c.bf16 %v1575, %v1574
    %v1586 = vpack.c.bf16 %v1577, %v1576
    %v1587 = vpack.c.bf16 %v1579, %v1578
    %v1589 = vshrl.u32 %v1580, 16
    %v1591 = vshll.u32 %v1580, 16
    %v1593 = vrot.slane %v1591, 1
    %v1594 = vor.u32 %v1589, %v1593
    %v1596 = vshll.u32 %v1581, 16
    %v1598 = vrot.slane %v1596, 1
    %v1599 = vsel %vm96, %v1594, %v1598
    %v1600 = vshrl.u32 %v1581, 16
    %v1602 = vor.u32 %v1600, %v1598
    %v1604 = vshll.u32 %v1582, 16
    %v1606 = vrot.slane %v1604, 1
    %v1607 = vsel %vm96, %v1602, %v1606
    %v1608 = vshrl.u32 %v1582, 16
    %v1610 = vor.u32 %v1608, %v1606
    %v1612 = vshll.u32 %v1583, 16
    %v1614 = vrot.slane %v1612, 1
    %v1615 = vsel %vm96, %v1610, %v1614
    %v1617 = vshrl.u32 %v1584, 16
    %v1619 = vshll.u32 %v1584, 16
    %v1621 = vrot.slane %v1619, 1
    %v1622 = vor.u32 %v1617, %v1621
    %v1624 = vshll.u32 %v1585, 16
    %v1626 = vrot.slane %v1624, 1
    %v1627 = vsel %vm96, %v1622, %v1626
    %v1628 = vshrl.u32 %v1585, 16
    %v1630 = vor.u32 %v1628, %v1626
    %v1632 = vshll.u32 %v1586, 16
    %v1634 = vrot.slane %v1632, 1
    %v1635 = vsel %vm96, %v1630, %v1634
    %v1636 = vshrl.u32 %v1586, 16
    %v1638 = vor.u32 %v1636, %v1634
    %v1640 = vshll.u32 %v1587, 16
    %v1642 = vrot.slane %v1640, 1
    %v1643 = vsel %vm96, %v1638, %v1642
    %1644 = vrot.lane.b32.xlu0 %v1599, 32
    %v1645 = vpop.permute.xlu0 %1644
    %1646 = vrot.lane.b32.xlu0 %v1607, 32
    %v1647 = vpop.permute.xlu0 %1646
    %1648 = vrot.lane.b32.xlu0 %v1615, 32
    %v1649 = vpop.permute.xlu0 %1648
    %1650 = vrot.lane.b32.xlu0 %v1627, 32
    %v1651 = vpop.permute.xlu0 %1650
    %1652 = vrot.lane.b32.xlu0 %v1635, 32
    %v1653 = vpop.permute.xlu0 %1652
    %1654 = vrot.lane.b32.xlu0 %v1643, 32
    %v1655 = vpop.permute.xlu0 %1654
    %v1664 = vrot.slane %v1580, 1
    %v1665 = vrot.slane %v1581, 1
    %v1666 = vsel %vm185, %v1664, %v1665
    %v1667 = vrot.slane %v1582, 1
    %v1668 = vsel %vm185, %v1665, %v1667
    %v1669 = vrot.slane %v1583, 1
    %v1670 = vsel %vm185, %v1667, %v1669
    %v1671 = vrot.slane %v1584, 1
    %v1672 = vrot.slane %v1585, 1
    %v1673 = vsel %vm185, %v1671, %v1672
    %v1674 = vrot.slane %v1586, 1
    %v1675 = vsel %vm185, %v1672, %v1674
    %v1676 = vrot.slane %v1587, 1
    %v1677 = vsel %vm185, %v1674, %v1676
    %1678 = vrot.lane.b32.xlu0 %v1666, 64
    %v1679 = vpop.permute.xlu0 %1678
    %1680 = vrot.lane.b32.xlu0 %v1668, 64
    %v1681 = vpop.permute.xlu0 %1680
    %1682 = vrot.lane.b32.xlu0 %v1670, 64
    %v1683 = vpop.permute.xlu0 %1682
    %1684 = vrot.lane.b32.xlu0 %v1673, 64
    %v1685 = vpop.permute.xlu0 %1684
    %1686 = vrot.lane.b32.xlu0 %v1675, 64
    %v1687 = vpop.permute.xlu0 %1686
    %1688 = vrot.lane.b32.xlu0 %v1677, 64
    %v1689 = vpop.permute.xlu0 %1688
    %v1690 = vrot.slane %v1589, 1
    %v1691 = vrot.slane %v1591, 2
    %v1692 = vor.u32 %v1690, %v1691
    %v1693 = vrot.slane %v1600, 1
    %v1694 = vrot.slane %v1596, 2
    %v1695 = vor.u32 %v1693, %v1694
    %v1696 = vsel %vm220, %v1692, %v1695
    %v1697 = vrot.slane %v1608, 1
    %v1698 = vrot.slane %v1604, 2
    %v1699 = vor.u32 %v1697, %v1698
    %v1700 = vsel %vm220, %v1695, %v1699
    %v1701 = vshrl.u32 %v1583, 16
    %v1703 = vrot.slane %v1701, 1
    %v1704 = vrot.slane %v1612, 2
    %v1705 = vor.u32 %v1703, %v1704
    %v1706 = vsel %vm220, %v1699, %v1705
    %v1707 = vrot.slane %v1617, 1
    %v1708 = vrot.slane %v1619, 2
    %v1709 = vor.u32 %v1707, %v1708
    %v1710 = vrot.slane %v1628, 1
    %v1711 = vrot.slane %v1624, 2
    %v1712 = vor.u32 %v1710, %v1711
    %v1713 = vsel %vm220, %v1709, %v1712
    %v1714 = vrot.slane %v1636, 1
    %v1715 = vrot.slane %v1632, 2
    %v1716 = vor.u32 %v1714, %v1715
    %v1717 = vsel %vm220, %v1712, %v1716
    %v1718 = vshrl.u32 %v1587, 16
    %v1720 = vrot.slane %v1718, 1
    %v1721 = vrot.slane %v1640, 2
    %v1722 = vor.u32 %v1720, %v1721
    %v1723 = vsel %vm220, %v1716, %v1722
    %1724 = vrot.lane.b32.xlu0 %v1696, 96
    %v1725 = vpop.permute.xlu0 %1724
    %1726 = vrot.lane.b32.xlu0 %v1700, 96
    %v1727 = vpop.permute.xlu0 %1726
    %1728 = vrot.lane.b32.xlu0 %v1706, 96
    %v1729 = vpop.permute.xlu0 %1728
    %1730 = vrot.lane.b32.xlu0 %v1713, 96
    %v1731 = vpop.permute.xlu0 %1730
    %1732 = vrot.lane.b32.xlu0 %v1717, 96
    %v1733 = vpop.permute.xlu0 %1732
    %1734 = vrot.lane.b32.xlu0 %v1723, 96
    %v1735 = vpop.permute.xlu0 %1734
    %v1736 = vrot.slane %v1580, 2
    %v1737 = vrot.slane %v1581, 2
    %v1738 = vsel %vm279, %v1736, %v1737
    %v1739 = vrot.slane %v1582, 2
    %v1740 = vsel %vm279, %v1737, %v1739
    %v1741 = vrot.slane %v1583, 2
    %v1742 = vsel %vm279, %v1739, %v1741
    %v1743 = vrot.slane %v1584, 2
    %v1744 = vrot.slane %v1585, 2
    %v1745 = vsel %vm279, %v1743, %v1744
    %v1746 = vrot.slane %v1586, 2
    %v1747 = vsel %vm279, %v1744, %v1746
    %v1748 = vrot.slane %v1587, 2
    %v1749 = vsel %vm279, %v1746, %v1748
    %v1750 = vrot.slane %v1589, 2
    %v1751 = vrot.slane %v1591, 3
    %v1752 = vor.u32 %v1750, %v1751
    %v1753 = vrot.slane %v1600, 2
    %v1754 = vrot.slane %v1596, 3
    %v1755 = vor.u32 %v1753, %v1754
    %v1756 = vsel %vm314, %v1752, %v1755
    %v1757 = vrot.slane %v1608, 2
    %v1758 = vrot.slane %v1604, 3
    %v1759 = vor.u32 %v1757, %v1758
    %v1760 = vsel %vm314, %v1755, %v1759
    %v1761 = vrot.slane %v1701, 2
    %v1762 = vrot.slane %v1612, 3
    %v1763 = vor.u32 %v1761, %v1762
    %v1764 = vsel %vm314, %v1759, %v1763
    %v1765 = vrot.slane %v1617, 2
    %v1766 = vrot.slane %v1619, 3
    %v1767 = vor.u32 %v1765, %v1766
    %v1768 = vrot.slane %v1628, 2
    %v1769 = vrot.slane %v1624, 3
    %v1770 = vor.u32 %v1768, %v1769
    %v1771 = vsel %vm314, %v1767, %v1770
    %v1772 = vrot.slane %v1636, 2
    %v1773 = vrot.slane %v1632, 3
    %v1774 = vor.u32 %v1772, %v1773
    %v1775 = vsel %vm314, %v1770, %v1774
    %v1776 = vrot.slane %v1718, 2
    %v1777 = vrot.slane %v1640, 3
    %v1778 = vor.u32 %v1776, %v1777
    %v1779 = vsel %vm314, %v1774, %v1778
    %1780 = vrot.lane.b32.xlu0 %v1756, 32
    %v1781 = vpop.permute.xlu0 %1780
    %1782 = vrot.lane.b32.xlu0 %v1760, 32
    %v1783 = vpop.permute.xlu0 %1782
    %1784 = vrot.lane.b32.xlu0 %v1764, 32
    %v1785 = vpop.permute.xlu0 %1784
    %1786 = vrot.lane.b32.xlu0 %v1771, 32
    %v1787 = vpop.permute.xlu0 %1786
    %1788 = vrot.lane.b32.xlu0 %v1775, 32
    %v1789 = vpop.permute.xlu0 %1788
    %1790 = vrot.lane.b32.xlu0 %v1779, 32
    %v1791 = vpop.permute.xlu0 %1790
    %v1792 = vrot.slane %v1580, 3
    %v1793 = vrot.slane %v1581, 3
    %v1794 = vsel %vm369, %v1792, %v1793
    %v1795 = vrot.slane %v1582, 3
    %v1796 = vsel %vm369, %v1793, %v1795
    %v1797 = vrot.slane %v1583, 3
    %v1798 = vsel %vm369, %v1795, %v1797
    %v1799 = vrot.slane %v1584, 3
    %v1800 = vrot.slane %v1585, 3
    %v1801 = vsel %vm369, %v1799, %v1800
    %v1802 = vrot.slane %v1586, 3
    %v1803 = vsel %vm369, %v1800, %v1802
    %v1804 = vrot.slane %v1587, 3
    %v1805 = vsel %vm369, %v1802, %v1804
    %1806 = vrot.lane.b32.xlu0 %v1794, 64
    %v1807 = vpop.permute.xlu0 %1806
    %1808 = vrot.lane.b32.xlu0 %v1796, 64
    %v1809 = vpop.permute.xlu0 %1808
    %1810 = vrot.lane.b32.xlu0 %v1798, 64
    %v1811 = vpop.permute.xlu0 %1810
    %1812 = vrot.lane.b32.xlu0 %v1801, 64
    %v1813 = vpop.permute.xlu0 %1812
    %1814 = vrot.lane.b32.xlu0 %v1803, 64
    %v1815 = vpop.permute.xlu0 %1814
    %1816 = vrot.lane.b32.xlu0 %v1805, 64
    %v1817 = vpop.permute.xlu0 %1816
    %v1818 = vrot.slane %v1589, 3
    %v1819 = vrot.slane %v1591, 4
    %v1820 = vor.u32 %v1818, %v1819
    %v1821 = vrot.slane %v1600, 3
    %v1822 = vrot.slane %v1596, 4
    %v1823 = vor.u32 %v1821, %v1822
    %v1824 = vsel %vm404, %v1820, %v1823
    %v1825 = vrot.slane %v1608, 3
    %v1826 = vrot.slane %v1604, 4
    %v1827 = vor.u32 %v1825, %v1826
    %v1828 = vsel %vm404, %v1823, %v1827
    %v1829 = vrot.slane %v1701, 3
    %v1830 = vrot.slane %v1612, 4
    %v1831 = vor.u32 %v1829, %v1830
    %v1832 = vsel %vm404, %v1827, %v1831
    %v1833 = vrot.slane %v1617, 3
    %v1834 = vrot.slane %v1619, 4
    %v1835 = vor.u32 %v1833, %v1834
    %v1836 = vrot.slane %v1628, 3
    %v1837 = vrot.slane %v1624, 4
    %v1838 = vor.u32 %v1836, %v1837
    %v1839 = vsel %vm404, %v1835, %v1838
    %v1840 = vrot.slane %v1636, 3
    %v1841 = vrot.slane %v1632, 4
    %v1842 = vor.u32 %v1840, %v1841
    %v1843 = vsel %vm404, %v1838, %v1842
    %v1844 = vrot.slane %v1718, 3
    %v1845 = vrot.slane %v1640, 4
    %v1846 = vor.u32 %v1844, %v1845
    %v1847 = vsel %vm404, %v1842, %v1846
    %1848 = vrot.lane.b32.xlu0 %v1824, 96
    %v1849 = vpop.permute.xlu0 %1848
    %1850 = vrot.lane.b32.xlu0 %v1828, 96
    %v1851 = vpop.permute.xlu0 %1850
    %1852 = vrot.lane.b32.xlu0 %v1832, 96
    %v1853 = vpop.permute.xlu0 %1852
    %1854 = vrot.lane.b32.xlu0 %v1839, 96
    %v1855 = vpop.permute.xlu0 %1854
    %1856 = vrot.lane.b32.xlu0 %v1843, 96
    %v1857 = vpop.permute.xlu0 %1856
    %1858 = vrot.lane.b32.xlu0 %v1847, 96
    %v1859 = vpop.permute.xlu0 %1858
    %vm1860 = vcmask 1043456
    %v1861 = vrot.slane %v1580, 4
    %v1862 = vrot.slane %v1581, 4
    %v1863 = vsel %vm1860, %v1861, %v1862
    %v1864 = vrot.slane %v1582, 4
    %v1865 = vsel %vm1860, %v1862, %v1864
    %v1866 = vrot.slane %v1583, 4
    %v1867 = vsel %vm1860, %v1864, %v1866
    %v1868 = vrot.slane %v1584, 4
    %v1869 = vrot.slane %v1585, 4
    %v1870 = vsel %vm1860, %v1868, %v1869
    %v1871 = vrot.slane %v1586, 4
    %v1872 = vsel %vm1860, %v1869, %v1871
    %v1873 = vrot.slane %v1587, 4
    %v1874 = vsel %vm1860, %v1871, %v1873
    %vm1875 = vsmask.f32 3328
    %v1876 = vrot.slane %v1589, 4
    %v1877 = vrot.slane %v1591, 5
    %v1878 = vor.u32 %v1876, %v1877
    %v1879 = vrot.slane %v1600, 4
    %v1880 = vrot.slane %v1596, 5
    %v1881 = vor.u32 %v1879, %v1880
    %v1882 = vsel %vm1875, %v1878, %v1881
    %v1883 = vrot.slane %v1608, 4
    %v1884 = vrot.slane %v1604, 5
    %v1885 = vor.u32 %v1883, %v1884
    %v1886 = vsel %vm1875, %v1881, %v1885
    %v1887 = vrot.slane %v1701, 4
    %v1888 = vrot.slane %v1612, 5
    %v1889 = vor.u32 %v1887, %v1888
    %v1890 = vsel %vm1875, %v1885, %v1889
    %v1891 = vrot.slane %v1617, 4
    %v1892 = vrot.slane %v1619, 5
    %v1893 = vor.u32 %v1891, %v1892
    %v1894 = vrot.slane %v1628, 4
    %v1895 = vrot.slane %v1624, 5
    %v1896 = vor.u32 %v1894, %v1895
    %v1897 = vsel %vm1875, %v1893, %v1896
    %v1898 = vrot.slane %v1636, 4
    %v1899 = vrot.slane %v1632, 5
    %v1900 = vor.u32 %v1898, %v1899
    %v1901 = vsel %vm1875, %v1896, %v1900
    %v1902 = vrot.slane %v1718, 4
    %v1903 = vrot.slane %v1640, 5
    %v1904 = vor.u32 %v1902, %v1903
    %v1905 = vsel %vm1875, %v1900, %v1904
    %1906 = vrot.lane.b32.xlu0 %v1882, 32
    %v1907 = vpop.permute.xlu0 %1906
    %1908 = vrot.lane.b32.xlu0 %v1886, 32
    %v1909 = vpop.permute.xlu0 %1908
    %1910 = vrot.lane.b32.xlu0 %v1890, 32
    %v1911 = vpop.permute.xlu0 %1910
    %1912 = vrot.lane.b32.xlu0 %v1897, 32
    %v1913 = vpop.permute.xlu0 %1912
    %1914 = vrot.lane.b32.xlu0 %v1901, 32
    %v1915 = vpop.permute.xlu0 %1914
    %1916 = vrot.lane.b32.xlu0 %v1905, 32
    %v1917 = vpop.permute.xlu0 %1916
    %vm1918 = vcmask 1042432
    %v1919 = vrot.slane %v1580, 5
    %v1920 = vrot.slane %v1581, 5
    %v1921 = vsel %vm1918, %v1919, %v1920
    %v1922 = vrot.slane %v1582, 5
    %v1923 = vsel %vm1918, %v1920, %v1922
    %v1924 = vrot.slane %v1583, 5
    %v1925 = vsel %vm1918, %v1922, %v1924
    %v1926 = vrot.slane %v1584, 5
    %v1927 = vrot.slane %v1585, 5
    %v1928 = vsel %vm1918, %v1926, %v1927
    %v1929 = vrot.slane %v1586, 5
    %v1930 = vsel %vm1918, %v1927, %v1929
    %v1931 = vrot.slane %v1587, 5
    %v1932 = vsel %vm1918, %v1929, %v1931
    %1933 = vrot.lane.b32.xlu0 %v1921, 64
    %v1934 = vpop.permute.xlu0 %1933
    %1935 = vrot.lane.b32.xlu0 %v1923, 64
    %v1936 = vpop.permute.xlu0 %1935
    %1937 = vrot.lane.b32.xlu0 %v1925, 64
    %v1938 = vpop.permute.xlu0 %1937
    %1939 = vrot.lane.b32.xlu0 %v1928, 64
    %v1940 = vpop.permute.xlu0 %1939
    %1941 = vrot.lane.b32.xlu0 %v1930, 64
    %v1942 = vpop.permute.xlu0 %1941
    %1943 = vrot.lane.b32.xlu0 %v1932, 64
    %v1944 = vpop.permute.xlu0 %1943
    %vm1945 = vsmask.f32 2304
    %v1946 = vrot.slane %v1589, 5
    %v1947 = vrot.slane %v1591, 6
    %v1948 = vor.u32 %v1946, %v1947
    %v1949 = vrot.slane %v1600, 5
    %v1950 = vrot.slane %v1596, 6
    %v1951 = vor.u32 %v1949, %v1950
    %v1952 = vsel %vm1945, %v1948, %v1951
    %v1953 = vrot.slane %v1608, 5
    %v1954 = vrot.slane %v1604, 6
    %v1955 = vor.u32 %v1953, %v1954
    %v1956 = vsel %vm1945, %v1951, %v1955
    %v1957 = vrot.slane %v1701, 5
    %v1958 = vrot.slane %v1612, 6
    %v1959 = vor.u32 %v1957, %v1958
    %v1960 = vsel %vm1945, %v1955, %v1959
    %v1961 = vrot.slane %v1617, 5
    %v1962 = vrot.slane %v1619, 6
    %v1963 = vor.u32 %v1961, %v1962
    %v1964 = vrot.slane %v1628, 5
    %v1965 = vrot.slane %v1624, 6
    %v1966 = vor.u32 %v1964, %v1965
    %v1967 = vsel %vm1945, %v1963, %v1966
    %v1968 = vrot.slane %v1636, 5
    %v1969 = vrot.slane %v1632, 6
    %v1970 = vor.u32 %v1968, %v1969
    %v1971 = vsel %vm1945, %v1966, %v1970
    %v1972 = vrot.slane %v1718, 5
    %v1973 = vrot.slane %v1640, 6
    %v1974 = vor.u32 %v1972, %v1973
    %v1975 = vsel %vm1945, %v1970, %v1974
    %1976 = vrot.lane.b32.xlu0 %v1952, 96
    %v1977 = vpop.permute.xlu0 %1976
    %1978 = vrot.lane.b32.xlu0 %v1956, 96
    %v1979 = vpop.permute.xlu0 %1978
    %1980 = vrot.lane.b32.xlu0 %v1960, 96
    %v1981 = vpop.permute.xlu0 %1980
    %1982 = vrot.lane.b32.xlu0 %v1967, 96
    %v1983 = vpop.permute.xlu0 %1982
    %1984 = vrot.lane.b32.xlu0 %v1971, 96
    %v1985 = vpop.permute.xlu0 %1984
    %1986 = vrot.lane.b32.xlu0 %v1975, 96
    %v1987 = vpop.permute.xlu0 %1986
    %vm1988 = vcmask 1041408
    %v1989 = vrot.slane %v1580, 6
    %v1990 = vrot.slane %v1581, 6
    %v1991 = vsel %vm1988, %v1989, %v1990
    %v1992 = vrot.slane %v1582, 6
    %v1993 = vsel %vm1988, %v1990, %v1992
    %v1994 = vrot.slane %v1583, 6
    %v1995 = vsel %vm1988, %v1992, %v1994
    %v1996 = vrot.slane %v1584, 6
    %v1997 = vrot.slane %v1585, 6
    %v1998 = vsel %vm1988, %v1996, %v1997
    %v1999 = vrot.slane %v1586, 6
    %v2000 = vsel %vm1988, %v1997, %v1999
    %v2001 = vrot.slane %v1587, 6
    %v2002 = vsel %vm1988, %v1999, %v2001
    %vm2003 = vsmask.f32 1280
    %v2004 = vrot.slane %v1589, 6
    %v2005 = vrot.slane %v1591, 7
    %v2006 = vor.u32 %v2004, %v2005
    %v2007 = vrot.slane %v1600, 6
    %v2008 = vrot.slane %v1596, 7
    %v2009 = vor.u32 %v2007, %v2008
    %v2010 = vsel %vm2003, %v2006, %v2009
    %v2011 = vrot.slane %v1608, 6
    %v2012 = vrot.slane %v1604, 7
    %v2013 = vor.u32 %v2011, %v2012
    %v2014 = vsel %vm2003, %v2009, %v2013
    %v2015 = vrot.slane %v1701, 6
    %v2016 = vrot.slane %v1612, 7
    %v2017 = vor.u32 %v2015, %v2016
    %v2018 = vsel %vm2003, %v2013, %v2017
    %v2019 = vrot.slane %v1617, 6
    %v2020 = vrot.slane %v1619, 7
    %v2021 = vor.u32 %v2019, %v2020
    %v2022 = vrot.slane %v1628, 6
    %v2023 = vrot.slane %v1624, 7
    %v2024 = vor.u32 %v2022, %v2023
    %v2025 = vsel %vm2003, %v2021, %v2024
    %v2026 = vrot.slane %v1636, 6
    %v2027 = vrot.slane %v1632, 7
    %v2028 = vor.u32 %v2026, %v2027
    %v2029 = vsel %vm2003, %v2024, %v2028
    %v2030 = vrot.slane %v1718, 6
    %v2031 = vrot.slane %v1640, 7
    %v2032 = vor.u32 %v2030, %v2031
    %v2033 = vsel %vm2003, %v2028, %v2032
    %2034 = vrot.lane.b32.xlu0 %v2010, 32
    %v2035 = vpop.permute.xlu0 %2034
    %2036 = vrot.lane.b32.xlu0 %v2014, 32
    %v2037 = vpop.permute.xlu0 %2036
    %2038 = vrot.lane.b32.xlu0 %v2018, 32
    %v2039 = vpop.permute.xlu0 %2038
    %2040 = vrot.lane.b32.xlu0 %v2025, 32
    %v2041 = vpop.permute.xlu0 %2040
    %2042 = vrot.lane.b32.xlu0 %v2029, 32
    %v2043 = vpop.permute.xlu0 %2042
    %2044 = vrot.lane.b32.xlu0 %v2033, 32
    %v2045 = vpop.permute.xlu0 %2044
    %vm2046 = vcmask 1040384
    %v2047 = vrot.slane %v1580, 7
    %v2048 = vrot.slane %v1581, 7
    %v2049 = vsel %vm2046, %v2047, %v2048
    %v2050 = vrot.slane %v1582, 7
    %v2051 = vsel %vm2046, %v2048, %v2050
    %v2052 = vrot.slane %v1583, 7
    %v2053 = vsel %vm2046, %v2050, %v2052
    %v2054 = vrot.slane %v1584, 7
    %v2055 = vrot.slane %v1585, 7
    %v2056 = vsel %vm2046, %v2054, %v2055
    %v2057 = vrot.slane %v1586, 7
    %v2058 = vsel %vm2046, %v2055, %v2057
    %v2059 = vrot.slane %v1587, 7
    %v2060 = vsel %vm2046, %v2057, %v2059
    %2061 = vrot.lane.b32.xlu0 %v2049, 64
    %v2062 = vpop.permute.xlu0 %2061
    %2063 = vrot.lane.b32.xlu0 %v2051, 64
    %v2064 = vpop.permute.xlu0 %2063
    %2065 = vrot.lane.b32.xlu0 %v2053, 64
    %v2066 = vpop.permute.xlu0 %2065
    %2067 = vrot.lane.b32.xlu0 %v2056, 64
    %v2068 = vpop.permute.xlu0 %2067
    %2069 = vrot.lane.b32.xlu0 %v2058, 64
    %v2070 = vpop.permute.xlu0 %2069
    %2071 = vrot.lane.b32.xlu0 %v2060, 64
    %v2072 = vpop.permute.xlu0 %2071
    %vm2073 = vsmask.f32 256
    %v2074 = vrot.slane %v1589, 7
    %v2075 = vrot.slane %v1600, 7
    %v2076 = vor.u32 %v2075, %v1596
    %v2077 = vsel %vm2073, %v2074, %v2076
    %v2078 = vrot.slane %v1608, 7
    %v2079 = vor.u32 %v2078, %v1604
    %v2080 = vsel %vm2073, %v2075, %v2079
    %v2081 = vrot.slane %v1701, 7
    %v2082 = vor.u32 %v2081, %v1612
    %v2083 = vsel %vm2073, %v2078, %v2082
    %v2084 = vrot.slane %v1617, 7
    %v2085 = vrot.slane %v1628, 7
    %v2086 = vor.u32 %v2085, %v1624
    %v2087 = vsel %vm2073, %v2084, %v2086
    %v2088 = vrot.slane %v1636, 7
    %v2089 = vor.u32 %v2088, %v1632
    %v2090 = vsel %vm2073, %v2085, %v2089
    %v2091 = vrot.slane %v1718, 7
    %v2092 = vor.u32 %v2091, %v1640
    %v2093 = vsel %vm2073, %v2088, %v2092
    %2094 = vrot.lane.b32.xlu0 %v2077, 96
    %v2095 = vpop.permute.xlu0 %2094
    %2096 = vrot.lane.b32.xlu0 %v2080, 96
    %v2097 = vpop.permute.xlu0 %2096
    %2098 = vrot.lane.b32.xlu0 %v2083, 96
    %v2099 = vpop.permute.xlu0 %2098
    %2100 = vrot.lane.b32.xlu0 %v2087, 96
    %v2101 = vpop.permute.xlu0 %2100
    %2102 = vrot.lane.b32.xlu0 %v2090, 96
    %v2103 = vpop.permute.xlu0 %2102
    %2104 = vrot.lane.b32.xlu0 %v2093, 96
    %v2105 = vpop.permute.xlu0 %2104
    %vm2106 = vcmask 261120
    %v2108 = vsel %vm2106, %v1580, %v1645
    %v2110 = vsel %vm2106, %v1581, %v1647
    %v2112 = vsel %vm2106, %v1582, %v1649
    %v2114 = vsel %vm2106, %v1584, %v1651
    %v2116 = vsel %vm2106, %v1585, %v1653
    %v2118 = vsel %vm2106, %v1586, %v1655
    %vm2119 = vcmask 523264
    %v2121 = vsel %vm2119, %v2108, %v1679
    %v2123 = vsel %vm2119, %v2110, %v1681
    %v2125 = vsel %vm2119, %v2112, %v1683
    %v2127 = vsel %vm2119, %v2114, %v1685
    %v2129 = vsel %vm2119, %v2116, %v1687
    %v2131 = vsel %vm2119, %v2118, %v1689
    %v2133 = vsel %vm1346, %v2121, %v1725
    %v2136 = vsel %vm1346, %v2123, %v1727
    %v2139 = vsel %vm1346, %v2125, %v1729
    %v2142 = vsel %vm1346, %v2127, %v1731
    %v2145 = vsel %vm1346, %v2129, %v1733
    %v2148 = vsel %vm1346, %v2131, %v1735
    %v2152 = vsel %vm2106, %v1738, %v1781
    %v2155 = vsel %vm2106, %v1740, %v1783
    %v2158 = vsel %vm2106, %v1742, %v1785
    %v2161 = vsel %vm2106, %v1745, %v1787
    %v2164 = vsel %vm2106, %v1747, %v1789
    %v2167 = vsel %vm2106, %v1749, %v1791
    %v2169 = vsel %vm2119, %v2152, %v1807
    %v2171 = vsel %vm2119, %v2155, %v1809
    %v2173 = vsel %vm2119, %v2158, %v1811
    %v2175 = vsel %vm2119, %v2161, %v1813
    %v2177 = vsel %vm2119, %v2164, %v1815
    %v2179 = vsel %vm2119, %v2167, %v1817
    %v2181 = vsel %vm1346, %v2169, %v1849
    %v2184 = vsel %vm1346, %v2171, %v1851
    %v2187 = vsel %vm1346, %v2173, %v1853
    %v2190 = vsel %vm1346, %v2175, %v1855
    %v2193 = vsel %vm1346, %v2177, %v1857
    %v2196 = vsel %vm1346, %v2179, %v1859
    %v2200 = vsel %vm2106, %v1863, %v1907
    %v2203 = vsel %vm2106, %v1865, %v1909
    %v2206 = vsel %vm2106, %v1867, %v1911
    %v2209 = vsel %vm2106, %v1870, %v1913
    %v2212 = vsel %vm2106, %v1872, %v1915
    %v2215 = vsel %vm2106, %v1874, %v1917
    %v2217 = vsel %vm2119, %v2200, %v1934
    %v2219 = vsel %vm2119, %v2203, %v1936
    %v2221 = vsel %vm2119, %v2206, %v1938
    %v2223 = vsel %vm2119, %v2209, %v1940
    %v2225 = vsel %vm2119, %v2212, %v1942
    %v2227 = vsel %vm2119, %v2215, %v1944
    %v2229 = vsel %vm1346, %v2217, %v1977
    %v2232 = vsel %vm1346, %v2219, %v1979
    %v2235 = vsel %vm1346, %v2221, %v1981
    %v2238 = vsel %vm1346, %v2223, %v1983
    %v2241 = vsel %vm1346, %v2225, %v1985
    %v2244 = vsel %vm1346, %v2227, %v1987
    %v2248 = vsel %vm2106, %v1991, %v2035
    %v2251 = vsel %vm2106, %v1993, %v2037
    %v2254 = vsel %vm2106, %v1995, %v2039
    %v2257 = vsel %vm2106, %v1998, %v2041
    %v2260 = vsel %vm2106, %v2000, %v2043
    %v2263 = vsel %vm2106, %v2002, %v2045
    %v2265 = vsel %vm2119, %v2248, %v2062
    %v2267 = vsel %vm2119, %v2251, %v2064
    %v2269 = vsel %vm2119, %v2254, %v2066
    %v2271 = vsel %vm2119, %v2257, %v2068
    %v2273 = vsel %vm2119, %v2260, %v2070
    %v2275 = vsel %vm2119, %v2263, %v2072
    %v2277 = vsel %vm1346, %v2265, %v2095
    %v2280 = vsel %vm1346, %v2267, %v2097
    %v2283 = vsel %vm1346, %v2269, %v2099
    %v2286 = vsel %vm1346, %v2271, %v2101
    %v2289 = vsel %vm1346, %v2273, %v2103
    %v2292 = vsel %vm1346, %v2275, %v2105
    %v2294 = vld [vmem:[%s3] sm:$0xf]
    %v2295 = vld [vmem:[%s3 + $0x4] sm:$0xf]
    %v2296 = vld [vmem:[%s3 + $0x8] sm:$0xf]
    %v2297 = vld [vmem:[%s3 + $0xc] sm:$0xf]
    %v2298 = vld [vmem:[%s3 + $0x10] sm:$0xf]
    %v2299 = vld [vmem:[%s3 + $0x14] sm:$0xf]
    %v2300 = vld [vmem:[%s3 + $0x18] sm:$0xf]
    %v2301 = vld [vmem:[%s3 + $0x1c] sm:$0xf]
    %v2302 = vld [vmem:[%s3 + $0x20] sm:$0xf]
    %v2303 = vld [vmem:[%s3 + $0x24] sm:$0xf]
    %v2304 = vld [vmem:[%s3 + $0x28] sm:$0xf]
    %v2305 = vld [vmem:[%s3 + $0x2c] sm:$0xf]
    %v2306 = vld [vmem:[%s3 + $0x30] sm:$0xf]
    %v2307 = vld [vmem:[%s3 + $0x34] sm:$0xf]
    %v2308 = vld [vmem:[%s3 + $0x38] sm:$0xf]
    %v2309 = vld [vmem:[%s3 + $0x3c] sm:$0xf]
    %v2310 = vld [vmem:[%s3 + $0x40] sm:$0xf]
    %v2311 = vld [vmem:[%s3 + $0x44] sm:$0xf]
    %v2312 = vld [vmem:[%s3 + $0x48] sm:$0xf]
    %v2313 = vld [vmem:[%s3 + $0x4c] sm:$0xf]
    %v2314 = vld [vmem:[%s3 + $0x50] sm:$0xf]
    %v2315 = vld [vmem:[%s3 + $0x54] sm:$0xf]
    %v2316 = vld [vmem:[%s3 + $0x58] sm:$0xf]
    %v2317 = vld [vmem:[%s3 + $0x5c] sm:$0xf]
    %v2318 = vld [vmem:[%s3 + $0x60] sm:$0xf]
    %v2319 = vld [vmem:[%s3 + $0x64] sm:$0xf]
    %v2320 = vld [vmem:[%s3 + $0x68] sm:$0xf]
    %v2321 = vld [vmem:[%s3 + $0x6c] sm:$0xf]
    %v2322 = vld [vmem:[%s3 + $0x70] sm:$0xf]
    %v2323 = vld [vmem:[%s3 + $0x74] sm:$0xf]
    %v2324 = vld [vmem:[%s3 + $0x78] sm:$0xf]
    %v2325 = vld [vmem:[%s3 + $0x7c] sm:$0xf]
    %v2326 = vld [vmem:[%s3 + $0x80] sm:$0xf]
    %v2327 = vld [vmem:[%s3 + $0x84] sm:$0xf]
    %v2328 = vld [vmem:[%s3 + $0x88] sm:$0xf]
    %v2329 = vld [vmem:[%s3 + $0x8c] sm:$0xf]
    %v2330 = vld [vmem:[%s3 + $0x90] sm:$0xf]
    %v2331 = vld [vmem:[%s3 + $0x94] sm:$0xf]
    %v2332 = vld [vmem:[%s3 + $0x98] sm:$0xf]
    %v2333 = vld [vmem:[%s3 + $0x9c] sm:$0xf]
    %v2334 = vld [vmem:[%s3 + $0xa0] sm:$0xf]
    %v2335 = vld [vmem:[%s3 + $0xa4] sm:$0xf]
    %v2336 = vld [vmem:[%s3 + $0xa8] sm:$0xf]
    %v2337 = vld [vmem:[%s3 + $0xac] sm:$0xf]
    %v2338 = vld [vmem:[%s3 + $0xb0] sm:$0xf]
    %v2339 = vld [vmem:[%s3 + $0xb4] sm:$0xf]
    %v2340 = vld [vmem:[%s3 + $0xb8] sm:$0xf]
    %v2341 = vld [vmem:[%s3 + $0xbc] sm:$0xf]
    %v2342 = vld [vmem:[%s3 + $0xc0] sm:$0xf]
    %v2343 = vld [vmem:[%s3 + $0xc4] sm:$0xf]
    %v2344 = vld [vmem:[%s3 + $0xc8] sm:$0xf]
    %v2345 = vld [vmem:[%s3 + $0xcc] sm:$0xf]
    %v2346 = vld [vmem:[%s3 + $0xd0] sm:$0xf]
    %v2347 = vld [vmem:[%s3 + $0xd4] sm:$0xf]
    %v2348 = vld [vmem:[%s3 + $0xd8] sm:$0xf]
    %v2349 = vld [vmem:[%s3 + $0xdc] sm:$0xf]
    %v2350 = vld [vmem:[%s3 + $0xe0] sm:$0xf]
    %v2351 = vld [vmem:[%s3 + $0xe4] sm:$0xf]
    %v2352 = vld [vmem:[%s3 + $0xe8] sm:$0xf]
    %v2353 = vld [vmem:[%s3 + $0xec] sm:$0xf]
    %v2354 = vld [vmem:[%s3 + $0xf0] sm:$0xf]
    %v2355 = vld [vmem:[%s3 + $0xf4] sm:$0xf]
    %v2356 = vld [vmem:[%s3 + $0xf8] sm:$0xf]
    %v2357 = vld [vmem:[%s3 + $0xfc] sm:$0xf]
    %v2358 = vld [vmem:[%s4] sm:$0x1]
    %v2360 = vlaneseq
    %v2361 = vshrl.u32 %v2360, 7
    %v2362 = vsub.s32 0, %v2361
    %v2363 = vrot.slane %v2358, %v2362
    %v2429 = vunpack.c.l.b16 %v2294
    %v2430 = vunpack.c.l.b16 %v2295
    %v2431 = vunpack.c.l.b16 %v2296
    %v2432 = vunpack.c.l.b16 %v2297
    %v2433 = vunpack.c.l.b16 %v2298
    %v2434 = vunpack.c.l.b16 %v2299
    %v2435 = vunpack.c.l.b16 %v2300
    %v2436 = vunpack.c.l.b16 %v2301
    %v2437 = vunpack.c.l.b16 %v2302
    %v2438 = vunpack.c.l.b16 %v2303
    %v2439 = vunpack.c.l.b16 %v2304
    %v2440 = vunpack.c.l.b16 %v2305
    %v2441 = vunpack.c.l.b16 %v2306
    %v2442 = vunpack.c.l.b16 %v2307
    %v2443 = vunpack.c.l.b16 %v2308
    %v2444 = vunpack.c.l.b16 %v2309
    %v2445 = vunpack.c.l.b16 %v2310
    %v2446 = vunpack.c.l.b16 %v2311
    %v2447 = vunpack.c.l.b16 %v2312
    %v2448 = vunpack.c.l.b16 %v2313
    %v2449 = vunpack.c.l.b16 %v2314
    %v2450 = vunpack.c.l.b16 %v2315
    %v2451 = vunpack.c.l.b16 %v2316
    %v2452 = vunpack.c.l.b16 %v2317
    %v2453 = vunpack.c.l.b16 %v2318
    %v2454 = vunpack.c.l.b16 %v2319
    %v2455 = vunpack.c.l.b16 %v2320
    %v2456 = vunpack.c.l.b16 %v2321
    %v2457 = vunpack.c.l.b16 %v2322
    %v2458 = vunpack.c.l.b16 %v2323
    %v2459 = vunpack.c.l.b16 %v2324
    %v2460 = vunpack.c.l.b16 %v2325
    %v2461 = vunpack.c.l.b16 %v2326
    %v2462 = vunpack.c.l.b16 %v2327
    %v2463 = vunpack.c.l.b16 %v2328
    %v2464 = vunpack.c.l.b16 %v2329
    %v2465 = vunpack.c.l.b16 %v2330
    %v2466 = vunpack.c.l.b16 %v2331
    %v2467 = vunpack.c.l.b16 %v2332
    %v2468 = vunpack.c.l.b16 %v2333
    %v2469 = vunpack.c.l.b16 %v2334
    %v2470 = vunpack.c.l.b16 %v2335
    %v2471 = vunpack.c.l.b16 %v2336
    %v2472 = vunpack.c.l.b16 %v2337
    %v2473 = vunpack.c.l.b16 %v2338
    %v2474 = vunpack.c.l.b16 %v2339
    %v2475 = vunpack.c.l.b16 %v2340
    %v2476 = vunpack.c.l.b16 %v2341
    %v2477 = vunpack.c.l.b16 %v2342
    %v2478 = vunpack.c.l.b16 %v2343
    %v2479 = vunpack.c.l.b16 %v2344
    %v2480 = vunpack.c.l.b16 %v2345
    %v2481 = vunpack.c.l.b16 %v2346
    %v2482 = vunpack.c.l.b16 %v2347
    %v2483 = vunpack.c.l.b16 %v2348
    %v2484 = vunpack.c.l.b16 %v2349
    %v2485 = vunpack.c.l.b16 %v2350
    %v2486 = vunpack.c.l.b16 %v2351
    %v2487 = vunpack.c.l.b16 %v2352
    %v2488 = vunpack.c.l.b16 %v2353
    %v2489 = vunpack.c.l.b16 %v2354
    %v2490 = vunpack.c.l.b16 %v2355
    %v2491 = vunpack.c.l.b16 %v2356
    %v2492 = vunpack.c.l.b16 %v2357
    %v2493 = vpack.c.b16 %v2430, %v2429
    %v2494 = vpack.c.b16 %v2432, %v2431
    %v2495 = vpack.c.b16 %v2434, %v2433
    %v2496 = vpack.c.b16 %v2436, %v2435
    %v2497 = vpack.c.b16 %v2438, %v2437
    %v2498 = vpack.c.b16 %v2440, %v2439
    %v2499 = vpack.c.b16 %v2442, %v2441
    %v2500 = vpack.c.b16 %v2444, %v2443
    %v2501 = vpack.c.b16 %v2446, %v2445
    %v2502 = vpack.c.b16 %v2448, %v2447
    %v2503 = vpack.c.b16 %v2450, %v2449
    %v2504 = vpack.c.b16 %v2452, %v2451
    %v2505 = vpack.c.b16 %v2454, %v2453
    %v2506 = vpack.c.b16 %v2456, %v2455
    %v2507 = vpack.c.b16 %v2458, %v2457
    %v2508 = vpack.c.b16 %v2460, %v2459
    %v2509 = vpack.c.b16 %v2462, %v2461
    %v2510 = vpack.c.b16 %v2464, %v2463
    %v2511 = vpack.c.b16 %v2466, %v2465
    %v2512 = vpack.c.b16 %v2468, %v2467
    %v2513 = vpack.c.b16 %v2470, %v2469
    %v2514 = vpack.c.b16 %v2472, %v2471
    %v2515 = vpack.c.b16 %v2474, %v2473
    %v2516 = vpack.c.b16 %v2476, %v2475
    %v2517 = vpack.c.b16 %v2478, %v2477
    %v2518 = vpack.c.b16 %v2480, %v2479
    %v2519 = vpack.c.b16 %v2482, %v2481
    %v2520 = vpack.c.b16 %v2484, %v2483
    %v2521 = vpack.c.b16 %v2486, %v2485
    %v2522 = vpack.c.b16 %v2488, %v2487
    %v2523 = vpack.c.b16 %v2490, %v2489
    %v2524 = vpack.c.b16 %v2492, %v2491
    %2557 = vmatprep.subr.bf16.mxu0 0
    %2558 = vmatpush1.bf16.msra.mxu0 %v2500
    %2559 = vmatprep.subr.bf16.mxu0 0
    %2560 = vmatpush1.bf16.msra.mxu0 %v2499
    %2561 = vmatprep.subr.bf16.mxu0 0
    %2562 = vmatpush1.bf16.msra.mxu0 %v2498
    %2563 = vmatprep.subr.bf16.mxu0 0
    %2564 = vmatpush1.bf16.msra.mxu0 %v2497
    %2565 = vmatprep.subr.bf16.mxu0 0
    %2566 = vmatpush1.bf16.msra.mxu0 %v2496
    %2567 = vmatprep.subr.bf16.mxu0 0
    %2568 = vmatpush1.bf16.msra.mxu0 %v2495
    %2569 = vmatprep.subr.bf16.mxu0 0
    %2570 = vmatpush1.bf16.msra.mxu0 %v2494
    %2571 = vmatprep.subr.bf16.mxu0 0
    %2572 = vmatpush1.bf16.msra.mxu0 %v2493
    %2573 = vmatprep.subr.bf16.mxu0 0
    %2574 = vmatpush2.bf16.msra.mxu0 %v2508
    %2575 = vmatprep.subr.bf16.mxu0 0
    %2576 = vmatpush2.bf16.msra.mxu0 %v2507
    %2577 = vmatprep.subr.bf16.mxu0 0
    %2578 = vmatpush2.bf16.msra.mxu0 %v2506
    %2579 = vmatprep.subr.bf16.mxu0 0
    %2580 = vmatpush2.bf16.msra.mxu0 %v2505
    %2581 = vmatprep.subr.bf16.mxu0 0
    %2582 = vmatpush2.bf16.msra.mxu0 %v2504
    %2583 = vmatprep.subr.bf16.mxu0 0
    %2584 = vmatpush2.bf16.msra.mxu0 %v2503
    %2585 = vmatprep.subr.bf16.mxu0 0
    %2586 = vmatpush2.bf16.msra.mxu0 %v2502
    %2587 = vmatprep.subr.bf16.mxu0 0
    %2588 = vmatpush2.bf16.msra.mxu0 %v2501
    %2589 = vmatprep.mubr.bf16.mxu0 %v2181
    %2590 = vmatmul.mubr.bf16.gmra.mxu0 %v2133
    %v2591 = vpop.f32.mrf.mxu0
    %v2592 = vadd.f32 %v2363, %v2591
    %v2593 = vpop.f32.mrf.mxu0
    %v2594 = vpop.f32.mrf.mxu0
    %v2595 = vadd.f32 %v2363, %v2594
    %v2596 = vpop.f32.mrf.mxu0
    %2597 = vmatprep.mubr.bf16.mxu0 %v2184
    %2598 = vmatmul.mubr.bf16.gmra.mxu0 %v2136
    %v2599 = vpop.f32.mrf.mxu0
    %v2600 = vadd.f32 %v2363, %v2599
    %v2601 = vpop.f32.mrf.mxu0
    %v2602 = vpop.f32.mrf.mxu0
    %v2603 = vadd.f32 %v2363, %v2602
    %v2604 = vpop.f32.mrf.mxu0
    %2605 = vmatprep.mubr.bf16.mxu0 %v2187
    %2606 = vmatmul.mubr.bf16.gmra.mxu0 %v2139
    %v2607 = vpop.f32.mrf.mxu0
    %v2608 = vadd.f32 %v2363, %v2607
    %v2609 = vpop.f32.mrf.mxu0
    %v2610 = vpop.f32.mrf.mxu0
    %v2611 = vadd.f32 %v2363, %v2610
    %v2612 = vpop.f32.mrf.mxu0
    %2613 = vmatprep.mubr.bf16.mxu0 %v2190
    %2614 = vmatmul.mubr.bf16.gmra.mxu0 %v2142
    %v2615 = vpop.f32.mrf.mxu0
    %v2616 = vadd.f32 %v2363, %v2615
    %v2617 = vpop.f32.mrf.mxu0
    %v2618 = vpop.f32.mrf.mxu0
    %v2619 = vadd.f32 %v2363, %v2618
    %v2620 = vpop.f32.mrf.mxu0
    %2621 = vmatprep.mubr.bf16.mxu0 %v2193
    %2622 = vmatmul.mubr.bf16.gmra.mxu0 %v2145
    %v2623 = vpop.f32.mrf.mxu0
    %v2624 = vadd.f32 %v2363, %v2623
    %v2625 = vpop.f32.mrf.mxu0
    %v2626 = vpop.f32.mrf.mxu0
    %v2627 = vadd.f32 %v2363, %v2626
    %v2628 = vpop.f32.mrf.mxu0
    %2629 = vmatprep.mubr.bf16.mxu0 %v2196
    %2630 = vmatmul.mubr.bf16.gmra.mxu0 %v2148
    %v2631 = vpop.f32.mrf.mxu0
    %v2632 = vadd.f32 %v2363, %v2631
    %v2633 = vpop.f32.mrf.mxu0
    %v2634 = vpop.f32.mrf.mxu0
    %v2635 = vadd.f32 %v2363, %v2634
    %v2636 = vpop.f32.mrf.mxu0
    %2637 = vdwg.mxu0
    %2638 = vmatprep.subr.bf16.mxu0 0
    %2639 = vmatpush1.bf16.msra.mxu0 %v2516
    %2640 = vmatprep.subr.bf16.mxu0 0
    %2641 = vmatpush1.bf16.msra.mxu0 %v2515
    %2642 = vmatprep.subr.bf16.mxu0 0
    %2643 = vmatpush1.bf16.msra.mxu0 %v2514
    %2644 = vmatprep.subr.bf16.mxu0 0
    %2645 = vmatpush1.bf16.msra.mxu0 %v2513
    %2646 = vmatprep.subr.bf16.mxu0 0
    %2647 = vmatpush1.bf16.msra.mxu0 %v2512
    %2648 = vmatprep.subr.bf16.mxu0 0
    %2649 = vmatpush1.bf16.msra.mxu0 %v2511
    %2650 = vmatprep.subr.bf16.mxu0 0
    %2651 = vmatpush1.bf16.msra.mxu0 %v2510
    %2652 = vmatprep.subr.bf16.mxu0 0
    %2653 = vmatpush1.bf16.msra.mxu0 %v2509
    %2654 = vmatprep.subr.bf16.mxu0 0
    %2655 = vmatpush2.bf16.msra.mxu0 %v2524
    %2656 = vmatprep.subr.bf16.mxu0 0
    %2657 = vmatpush2.bf16.msra.mxu0 %v2523
    %2658 = vmatprep.subr.bf16.mxu0 0
    %2659 = vmatpush2.bf16.msra.mxu0 %v2522
    %2660 = vmatprep.subr.bf16.mxu0 0
    %2661 = vmatpush2.bf16.msra.mxu0 %v2521
    %2662 = vmatprep.subr.bf16.mxu0 0
    %2663 = vmatpush2.bf16.msra.mxu0 %v2520
    %2664 = vmatprep.subr.bf16.mxu0 0
    %2665 = vmatpush2.bf16.msra.mxu0 %v2519
    %2666 = vmatprep.subr.bf16.mxu0 0
    %2667 = vmatpush2.bf16.msra.mxu0 %v2518
    %2668 = vmatprep.subr.bf16.mxu0 0
    %2669 = vmatpush2.bf16.msra.mxu0 %v2517
    %2670 = vmatprep.mubr.bf16.mxu0 %v2277
    %2671 = vmatmul.mubr.bf16.gmra.mxu0 %v2229
    %v2672 = vpop.f32.mrf.mxu0
    %v2673 = vadd.f32 %v2592, %v2672
    %v2674 = vpop.f32.mrf.mxu0
    %v2675 = vpop.f32.mrf.mxu0
    %v2676 = vadd.f32 %v2595, %v2675
    %v2677 = vpop.f32.mrf.mxu0
    %2678 = vmatprep.mubr.bf16.mxu0 %v2280
    %2679 = vmatmul.mubr.bf16.gmra.mxu0 %v2232
    %v2680 = vpop.f32.mrf.mxu0
    %v2681 = vadd.f32 %v2600, %v2680
    %v2682 = vpop.f32.mrf.mxu0
    %v2683 = vpop.f32.mrf.mxu0
    %v2684 = vadd.f32 %v2603, %v2683
    %v2685 = vpop.f32.mrf.mxu0
    %2686 = vmatprep.mubr.bf16.mxu0 %v2283
    %2687 = vmatmul.mubr.bf16.gmra.mxu0 %v2235
    %v2688 = vpop.f32.mrf.mxu0
    %v2689 = vadd.f32 %v2608, %v2688
    %v2690 = vpop.f32.mrf.mxu0
    %v2691 = vpop.f32.mrf.mxu0
    %v2692 = vadd.f32 %v2611, %v2691
    %v2693 = vpop.f32.mrf.mxu0
    %2694 = vmatprep.mubr.bf16.mxu0 %v2286
    %2695 = vmatmul.mubr.bf16.gmra.mxu0 %v2238
    %v2696 = vpop.f32.mrf.mxu0
    %v2697 = vadd.f32 %v2616, %v2696
    %v2698 = vpop.f32.mrf.mxu0
    %v2699 = vpop.f32.mrf.mxu0
    %v2700 = vadd.f32 %v2619, %v2699
    %v2701 = vpop.f32.mrf.mxu0
    %2702 = vmatprep.mubr.bf16.mxu0 %v2289
    %2703 = vmatmul.mubr.bf16.gmra.mxu0 %v2241
    %v2704 = vpop.f32.mrf.mxu0
    %v2705 = vadd.f32 %v2624, %v2704
    %v2706 = vpop.f32.mrf.mxu0
    %v2707 = vpop.f32.mrf.mxu0
    %v2708 = vadd.f32 %v2627, %v2707
    %v2709 = vpop.f32.mrf.mxu0
    %2710 = vmatprep.mubr.bf16.mxu0 %v2292
    %2711 = vmatmul.mubr.bf16.gmra.mxu0 %v2244
    %v2712 = vpop.f32.mrf.mxu0
    %v2713 = vadd.f32 %v2632, %v2712
    %v2714 = vpop.f32.mrf.mxu0
    %v2715 = vpop.f32.mrf.mxu0
    %v2716 = vadd.f32 %v2635, %v2715
    %v2717 = vpop.f32.mrf.mxu0
    %2718 = vdwg.mxu0
    %v2719 = vmax.f32 %v2673, 0.0
    %v2720 = vmax.f32 %v2676, 0.0
    %v2721 = vmax.f32 %v2681, 0.0
    %v2722 = vmax.f32 %v2684, 0.0
    %v2723 = vmax.f32 %v2689, 0.0
    %v2724 = vmax.f32 %v2692, 0.0
    %v2725 = vmax.f32 %v2697, 0.0
    %v2726 = vmax.f32 %v2700, 0.0
    %v2727 = vmax.f32 %v2705, 0.0
    %v2728 = vmax.f32 %v2708, 0.0
    %v2729 = vmax.f32 %v2713, 0.0
    %v2730 = vmax.f32 %v2716, 0.0
    %v2731 = vpack.c.bf16 %v2720, %v2719
    %v2732 = vpack.c.bf16 %v2722, %v2721
    %v2733 = vpack.c.bf16 %v2724, %v2723
    %v2734 = vpack.c.bf16 %v2726, %v2725
    %v2735 = vpack.c.bf16 %v2728, %v2727
    %v2736 = vpack.c.bf16 %v2730, %v2729
    %v2738 = vshrl.u32 %v2731, 16
    %v2740 = vshll.u32 %v2731, 16
    %v2742 = vrot.slane %v2740, 1
    %v2743 = vor.u32 %v2738, %v2742
    %v2745 = vshll.u32 %v2732, 16
    %v2747 = vrot.slane %v2745, 1
    %v2748 = vsel %vm96, %v2743, %v2747
    %v2749 = vshrl.u32 %v2732, 16
    %v2751 = vor.u32 %v2749, %v2747
    %v2753 = vshll.u32 %v2733, 16
    %v2755 = vrot.slane %v2753, 1
    %v2756 = vsel %vm96, %v2751, %v2755
    %v2758 = vshrl.u32 %v2734, 16
    %v2760 = vshll.u32 %v2734, 16
    %v2762 = vrot.slane %v2760, 1
    %v2763 = vor.u32 %v2758, %v2762
    %v2765 = vshll.u32 %v2735, 16
    %v2767 = vrot.slane %v2765, 1
    %v2768 = vsel %vm96, %v2763, %v2767
    %v2769 = vshrl.u32 %v2735, 16
    %v2771 = vor.u32 %v2769, %v2767
    %v2773 = vshll.u32 %v2736, 16
    %v2775 = vrot.slane %v2773, 1
    %v2776 = vsel %vm96, %v2771, %v2775
    %2777 = vrot.lane.b32.xlu0 %v2748, 64
    %v2778 = vpop.permute.xlu0 %2777
    %2779 = vrot.lane.b32.xlu0 %v2756, 64
    %v2780 = vpop.permute.xlu0 %2779
    %2781 = vrot.lane.b32.xlu0 %v2768, 64
    %v2782 = vpop.permute.xlu0 %2781
    %2783 = vrot.lane.b32.xlu0 %v2776, 64
    %v2784 = vpop.permute.xlu0 %2783
    %v2791 = vrot.slane %v2731, 1
    %v2792 = vrot.slane %v2732, 1
    %v2793 = vsel %vm185, %v2791, %v2792
    %v2794 = vrot.slane %v2733, 1
    %v2795 = vsel %vm185, %v2792, %v2794
    %v2796 = vrot.slane %v2734, 1
    %v2797 = vrot.slane %v2735, 1
    %v2798 = vsel %vm185, %v2796, %v2797
    %v2799 = vrot.slane %v2736, 1
    %v2800 = vsel %vm185, %v2797, %v2799
    %v2801 = vrot.slane %v2738, 1
    %v2802 = vrot.slane %v2740, 2
    %v2803 = vor.u32 %v2801, %v2802
    %v2804 = vrot.slane %v2749, 1
    %v2805 = vrot.slane %v2745, 2
    %v2806 = vor.u32 %v2804, %v2805
    %v2807 = vsel %vm220, %v2803, %v2806
    %v2808 = vshrl.u32 %v2733, 16
    %v2810 = vrot.slane %v2808, 1
    %v2811 = vrot.slane %v2753, 2
    %v2812 = vor.u32 %v2810, %v2811
    %v2813 = vsel %vm220, %v2806, %v2812
    %v2814 = vrot.slane %v2758, 1
    %v2815 = vrot.slane %v2760, 2
    %v2816 = vor.u32 %v2814, %v2815
    %v2817 = vrot.slane %v2769, 1
    %v2818 = vrot.slane %v2765, 2
    %v2819 = vor.u32 %v2817, %v2818
    %v2820 = vsel %vm220, %v2816, %v2819
    %v2821 = vshrl.u32 %v2736, 16
    %v2823 = vrot.slane %v2821, 1
    %v2824 = vrot.slane %v2773, 2
    %v2825 = vor.u32 %v2823, %v2824
    %v2826 = vsel %vm220, %v2819, %v2825
    %2827 = vrot.lane.b32.xlu0 %v2807, 64
    %v2828 = vpop.permute.xlu0 %2827
    %2829 = vrot.lane.b32.xlu0 %v2813, 64
    %v2830 = vpop.permute.xlu0 %2829
    %2831 = vrot.lane.b32.xlu0 %v2820, 64
    %v2832 = vpop.permute.xlu0 %2831
    %2833 = vrot.lane.b32.xlu0 %v2826, 64
    %v2834 = vpop.permute.xlu0 %2833
    %v2835 = vrot.slane %v2731, 2
    %v2836 = vrot.slane %v2732, 2
    %v2837 = vsel %vm279, %v2835, %v2836
    %v2838 = vrot.slane %v2733, 2
    %v2839 = vsel %vm279, %v2836, %v2838
    %v2840 = vrot.slane %v2734, 2
    %v2841 = vrot.slane %v2735, 2
    %v2842 = vsel %vm279, %v2840, %v2841
    %v2843 = vrot.slane %v2736, 2
    %v2844 = vsel %vm279, %v2841, %v2843
    %v2845 = vrot.slane %v2738, 2
    %v2846 = vrot.slane %v2740, 3
    %v2847 = vor.u32 %v2845, %v2846
    %v2848 = vrot.slane %v2749, 2
    %v2849 = vrot.slane %v2745, 3
    %v2850 = vor.u32 %v2848, %v2849
    %v2851 = vsel %vm314, %v2847, %v2850
    %v2852 = vrot.slane %v2808, 2
    %v2853 = vrot.slane %v2753, 3
    %v2854 = vor.u32 %v2852, %v2853
    %v2855 = vsel %vm314, %v2850, %v2854
    %v2856 = vrot.slane %v2758, 2
    %v2857 = vrot.slane %v2760, 3
    %v2858 = vor.u32 %v2856, %v2857
    %v2859 = vrot.slane %v2769, 2
    %v2860 = vrot.slane %v2765, 3
    %v2861 = vor.u32 %v2859, %v2860
    %v2862 = vsel %vm314, %v2858, %v2861
    %v2863 = vrot.slane %v2821, 2
    %v2864 = vrot.slane %v2773, 3
    %v2865 = vor.u32 %v2863, %v2864
    %v2866 = vsel %vm314, %v2861, %v2865
    %2867 = vrot.lane.b32.xlu0 %v2851, 64
    %v2868 = vpop.permute.xlu0 %2867
    %2869 = vrot.lane.b32.xlu0 %v2855, 64
    %v2870 = vpop.permute.xlu0 %2869
    %2871 = vrot.lane.b32.xlu0 %v2862, 64
    %v2872 = vpop.permute.xlu0 %2871
    %2873 = vrot.lane.b32.xlu0 %v2866, 64
    %v2874 = vpop.permute.xlu0 %2873
    %v2875 = vrot.slane %v2731, 3
    %v2876 = vrot.slane %v2732, 3
    %v2877 = vsel %vm369, %v2875, %v2876
    %v2878 = vrot.slane %v2733, 3
    %v2879 = vsel %vm369, %v2876, %v2878
    %v2880 = vrot.slane %v2734, 3
    %v2881 = vrot.slane %v2735, 3
    %v2882 = vsel %vm369, %v2880, %v2881
    %v2883 = vrot.slane %v2736, 3
    %v2884 = vsel %vm369, %v2881, %v2883
    %v2885 = vrot.slane %v2738, 3
    %v2886 = vrot.slane %v2740, 4
    %v2887 = vor.u32 %v2885, %v2886
    %v2888 = vrot.slane %v2749, 3
    %v2889 = vrot.slane %v2745, 4
    %v2890 = vor.u32 %v2888, %v2889
    %v2891 = vsel %vm404, %v2887, %v2890
    %v2892 = vrot.slane %v2808, 3
    %v2893 = vrot.slane %v2753, 4
    %v2894 = vor.u32 %v2892, %v2893
    %v2895 = vsel %vm404, %v2890, %v2894
    %v2896 = vrot.slane %v2758, 3
    %v2897 = vrot.slane %v2760, 4
    %v2898 = vor.u32 %v2896, %v2897
    %v2899 = vrot.slane %v2769, 3
    %v2900 = vrot.slane %v2765, 4
    %v2901 = vor.u32 %v2899, %v2900
    %v2902 = vsel %vm404, %v2898, %v2901
    %v2903 = vrot.slane %v2821, 3
    %v2904 = vrot.slane %v2773, 4
    %v2905 = vor.u32 %v2903, %v2904
    %v2906 = vsel %vm404, %v2901, %v2905
    %2907 = vrot.lane.b32.xlu0 %v2891, 64
    %v2908 = vpop.permute.xlu0 %2907
    %2909 = vrot.lane.b32.xlu0 %v2895, 64
    %v2910 = vpop.permute.xlu0 %2909
    %2911 = vrot.lane.b32.xlu0 %v2902, 64
    %v2912 = vpop.permute.xlu0 %2911
    %2913 = vrot.lane.b32.xlu0 %v2906, 64
    %v2914 = vpop.permute.xlu0 %2913
    %v2916 = vsel %vm2119, %v2731, %v2778
    %v2919 = vsel %vm2119, %v2732, %v2780
    %v2922 = vsel %vm2119, %v2734, %v2782
    %v2925 = vsel %vm2119, %v2735, %v2784
    %v2929 = vsel %vm2119, %v2793, %v2828
    %v2933 = vsel %vm2119, %v2795, %v2830
    %v2937 = vsel %vm2119, %v2798, %v2832
    %v2941 = vsel %vm2119, %v2800, %v2834
    %v2945 = vsel %vm2119, %v2837, %v2868
    %v2949 = vsel %vm2119, %v2839, %v2870
    %v2953 = vsel %vm2119, %v2842, %v2872
    %v2957 = vsel %vm2119, %v2844, %v2874
    %v2961 = vsel %vm2119, %v2877, %v2908
    %v2965 = vsel %vm2119, %v2879, %v2910
    %v2969 = vsel %vm2119, %v2882, %v2912
    %v2973 = vsel %vm2119, %v2884, %v2914
    %v2975 = vld [vmem:[%s5] sm:$0xf]
    %v2976 = vld [vmem:[%s5 + $0x4] sm:$0xf]
    %v2977 = vld [vmem:[%s5 + $0x8] sm:$0xf]
    %v2978 = vld [vmem:[%s5 + $0xc] sm:$0xf]
    %v2979 = vld [vmem:[%s5 + $0x10] sm:$0xf]
    %v2980 = vld [vmem:[%s5 + $0x14] sm:$0xf]
    %v2981 = vld [vmem:[%s5 + $0x18] sm:$0xf]
    %v2982 = vld [vmem:[%s5 + $0x1c] sm:$0xf]
    %v2983 = vld [vmem:[%s5 + $0x20] sm:$0xf]
    %v2984 = vld [vmem:[%s5 + $0x24] sm:$0xf]
    %v2985 = vld [vmem:[%s5 + $0x28] sm:$0xf]
    %v2986 = vld [vmem:[%s5 + $0x2c] sm:$0xf]
    %v2987 = vld [vmem:[%s5 + $0x30] sm:$0xf]
    %v2988 = vld [vmem:[%s5 + $0x34] sm:$0xf]
    %v2989 = vld [vmem:[%s5 + $0x38] sm:$0xf]
    %v2990 = vld [vmem:[%s5 + $0x3c] sm:$0xf]
    %v2991 = vld [vmem:[%s5 + $0x40] sm:$0xf]
    %v2992 = vld [vmem:[%s5 + $0x44] sm:$0xf]
    %v2993 = vld [vmem:[%s5 + $0x48] sm:$0xf]
    %v2994 = vld [vmem:[%s5 + $0x4c] sm:$0xf]
    %v2995 = vld [vmem:[%s5 + $0x50] sm:$0xf]
    %v2996 = vld [vmem:[%s5 + $0x54] sm:$0xf]
    %v2997 = vld [vmem:[%s5 + $0x58] sm:$0xf]
    %v2998 = vld [vmem:[%s5 + $0x5c] sm:$0xf]
    %v2999 = vld [vmem:[%s5 + $0x60] sm:$0xf]
    %v3000 = vld [vmem:[%s5 + $0x64] sm:$0xf]
    %v3001 = vld [vmem:[%s5 + $0x68] sm:$0xf]
    %v3002 = vld [vmem:[%s5 + $0x6c] sm:$0xf]
    %v3003 = vld [vmem:[%s5 + $0x70] sm:$0xf]
    %v3004 = vld [vmem:[%s5 + $0x74] sm:$0xf]
    %v3005 = vld [vmem:[%s5 + $0x78] sm:$0xf]
    %v3006 = vld [vmem:[%s5 + $0x7c] sm:$0xf]
    %v3007 = vld [vmem:[%s5 + $0x80] sm:$0xf]
    %v3008 = vld [vmem:[%s5 + $0x84] sm:$0xf]
    %v3009 = vld [vmem:[%s5 + $0x88] sm:$0xf]
    %v3010 = vld [vmem:[%s5 + $0x8c] sm:$0xf]
    %v3011 = vld [vmem:[%s5 + $0x90] sm:$0xf]
    %v3012 = vld [vmem:[%s5 + $0x94] sm:$0xf]
    %v3013 = vld [vmem:[%s5 + $0x98] sm:$0xf]
    %v3014 = vld [vmem:[%s5 + $0x9c] sm:$0xf]
    %v3015 = vld [vmem:[%s5 + $0xa0] sm:$0xf]
    %v3016 = vld [vmem:[%s5 + $0xa4] sm:$0xf]
    %v3017 = vld [vmem:[%s5 + $0xa8] sm:$0xf]
    %v3018 = vld [vmem:[%s5 + $0xac] sm:$0xf]
    %v3019 = vld [vmem:[%s5 + $0xb0] sm:$0xf]
    %v3020 = vld [vmem:[%s5 + $0xb4] sm:$0xf]
    %v3021 = vld [vmem:[%s5 + $0xb8] sm:$0xf]
    %v3022 = vld [vmem:[%s5 + $0xbc] sm:$0xf]
    %v3023 = vld [vmem:[%s5 + $0xc0] sm:$0xf]
    %v3024 = vld [vmem:[%s5 + $0xc4] sm:$0xf]
    %v3025 = vld [vmem:[%s5 + $0xc8] sm:$0xf]
    %v3026 = vld [vmem:[%s5 + $0xcc] sm:$0xf]
    %v3027 = vld [vmem:[%s5 + $0xd0] sm:$0xf]
    %v3028 = vld [vmem:[%s5 + $0xd4] sm:$0xf]
    %v3029 = vld [vmem:[%s5 + $0xd8] sm:$0xf]
    %v3030 = vld [vmem:[%s5 + $0xdc] sm:$0xf]
    %v3031 = vld [vmem:[%s5 + $0xe0] sm:$0xf]
    %v3032 = vld [vmem:[%s5 + $0xe4] sm:$0xf]
    %v3033 = vld [vmem:[%s5 + $0xe8] sm:$0xf]
    %v3034 = vld [vmem:[%s5 + $0xec] sm:$0xf]
    %v3035 = vld [vmem:[%s5 + $0xf0] sm:$0xf]
    %v3036 = vld [vmem:[%s5 + $0xf4] sm:$0xf]
    %v3037 = vld [vmem:[%s5 + $0xf8] sm:$0xf]
    %v3038 = vld [vmem:[%s5 + $0xfc] sm:$0xf]
    %v3039 = vld [vmem:[%s6] sm:$0x1]
    %v3041 = vlaneseq
    %v3042 = vshrl.u32 %v3041, 7
    %v3043 = vsub.s32 0, %v3042
    %v3044 = vrot.slane %v3039, %v3043
    %v3110 = vunpack.c.l.b16 %v2975
    %v3111 = vunpack.c.l.b16 %v2976
    %v3112 = vunpack.c.l.b16 %v2977
    %v3113 = vunpack.c.l.b16 %v2978
    %v3114 = vunpack.c.l.b16 %v2979
    %v3115 = vunpack.c.l.b16 %v2980
    %v3116 = vunpack.c.l.b16 %v2981
    %v3117 = vunpack.c.l.b16 %v2982
    %v3118 = vunpack.c.l.b16 %v2983
    %v3119 = vunpack.c.l.b16 %v2984
    %v3120 = vunpack.c.l.b16 %v2985
    %v3121 = vunpack.c.l.b16 %v2986
    %v3122 = vunpack.c.l.b16 %v2987
    %v3123 = vunpack.c.l.b16 %v2988
    %v3124 = vunpack.c.l.b16 %v2989
    %v3125 = vunpack.c.l.b16 %v2990
    %v3126 = vunpack.c.l.b16 %v2991
    %v3127 = vunpack.c.l.b16 %v2992
    %v3128 = vunpack.c.l.b16 %v2993
    %v3129 = vunpack.c.l.b16 %v2994
    %v3130 = vunpack.c.l.b16 %v2995
    %v3131 = vunpack.c.l.b16 %v2996
    %v3132 = vunpack.c.l.b16 %v2997
    %v3133 = vunpack.c.l.b16 %v2998
    %v3134 = vunpack.c.l.b16 %v2999
    %v3135 = vunpack.c.l.b16 %v3000
    %v3136 = vunpack.c.l.b16 %v3001
    %v3137 = vunpack.c.l.b16 %v3002
    %v3138 = vunpack.c.l.b16 %v3003
    %v3139 = vunpack.c.l.b16 %v3004
    %v3140 = vunpack.c.l.b16 %v3005
    %v3141 = vunpack.c.l.b16 %v3006
    %v3142 = vunpack.c.l.b16 %v3007
    %v3143 = vunpack.c.l.b16 %v3008
    %v3144 = vunpack.c.l.b16 %v3009
    %v3145 = vunpack.c.l.b16 %v3010
    %v3146 = vunpack.c.l.b16 %v3011
    %v3147 = vunpack.c.l.b16 %v3012
    %v3148 = vunpack.c.l.b16 %v3013
    %v3149 = vunpack.c.l.b16 %v3014
    %v3150 = vunpack.c.l.b16 %v3015
    %v3151 = vunpack.c.l.b16 %v3016
    %v3152 = vunpack.c.l.b16 %v3017
    %v3153 = vunpack.c.l.b16 %v3018
    %v3154 = vunpack.c.l.b16 %v3019
    %v3155 = vunpack.c.l.b16 %v3020
    %v3156 = vunpack.c.l.b16 %v3021
    %v3157 = vunpack.c.l.b16 %v3022
    %v3158 = vunpack.c.l.b16 %v3023
    %v3159 = vunpack.c.l.b16 %v3024
    %v3160 = vunpack.c.l.b16 %v3025
    %v3161 = vunpack.c.l.b16 %v3026
    %v3162 = vunpack.c.l.b16 %v3027
    %v3163 = vunpack.c.l.b16 %v3028
    %v3164 = vunpack.c.l.b16 %v3029
    %v3165 = vunpack.c.l.b16 %v3030
    %v3166 = vunpack.c.l.b16 %v3031
    %v3167 = vunpack.c.l.b16 %v3032
    %v3168 = vunpack.c.l.b16 %v3033
    %v3169 = vunpack.c.l.b16 %v3034
    %v3170 = vunpack.c.l.b16 %v3035
    %v3171 = vunpack.c.l.b16 %v3036
    %v3172 = vunpack.c.l.b16 %v3037
    %v3173 = vunpack.c.l.b16 %v3038
    %v3174 = vpack.c.b16 %v3111, %v3110
    %v3175 = vpack.c.b16 %v3113, %v3112
    %v3176 = vpack.c.b16 %v3115, %v3114
    %v3177 = vpack.c.b16 %v3117, %v3116
    %v3178 = vpack.c.b16 %v3119, %v3118
    %v3179 = vpack.c.b16 %v3121, %v3120
    %v3180 = vpack.c.b16 %v3123, %v3122
    %v3181 = vpack.c.b16 %v3125, %v3124
    %v3182 = vpack.c.b16 %v3127, %v3126
    %v3183 = vpack.c.b16 %v3129, %v3128
    %v3184 = vpack.c.b16 %v3131, %v3130
    %v3185 = vpack.c.b16 %v3133, %v3132
    %v3186 = vpack.c.b16 %v3135, %v3134
    %v3187 = vpack.c.b16 %v3137, %v3136
    %v3188 = vpack.c.b16 %v3139, %v3138
    %v3189 = vpack.c.b16 %v3141, %v3140
    %v3190 = vpack.c.b16 %v3143, %v3142
    %v3191 = vpack.c.b16 %v3145, %v3144
    %v3192 = vpack.c.b16 %v3147, %v3146
    %v3193 = vpack.c.b16 %v3149, %v3148
    %v3194 = vpack.c.b16 %v3151, %v3150
    %v3195 = vpack.c.b16 %v3153, %v3152
    %v3196 = vpack.c.b16 %v3155, %v3154
    %v3197 = vpack.c.b16 %v3157, %v3156
    %v3198 = vpack.c.b16 %v3159, %v3158
    %v3199 = vpack.c.b16 %v3161, %v3160
    %v3200 = vpack.c.b16 %v3163, %v3162
    %v3201 = vpack.c.b16 %v3165, %v3164
    %v3202 = vpack.c.b16 %v3167, %v3166
    %v3203 = vpack.c.b16 %v3169, %v3168
    %v3204 = vpack.c.b16 %v3171, %v3170
    %v3205 = vpack.c.b16 %v3173, %v3172
    %3238 = vmatprep.subr.bf16.mxu0 0
    %3239 = vmatpush1.bf16.msra.mxu0 %v3181
    %3240 = vmatprep.subr.bf16.mxu0 0
    %3241 = vmatpush1.bf16.msra.mxu0 %v3180
    %3242 = vmatprep.subr.bf16.mxu0 0
    %3243 = vmatpush1.bf16.msra.mxu0 %v3179
    %3244 = vmatprep.subr.bf16.mxu0 0
    %3245 = vmatpush1.bf16.msra.mxu0 %v3178
    %3246 = vmatprep.subr.bf16.mxu0 0
    %3247 = vmatpush1.bf16.msra.mxu0 %v3177
    %3248 = vmatprep.subr.bf16.mxu0 0
    %3249 = vmatpush1.bf16.msra.mxu0 %v3176
    %3250 = vmatprep.subr.bf16.mxu0 0
    %3251 = vmatpush1.bf16.msra.mxu0 %v3175
    %3252 = vmatprep.subr.bf16.mxu0 0
    %3253 = vmatpush1.bf16.msra.mxu0 %v3174
    %3254 = vmatprep.subr.bf16.mxu0 0
    %3255 = vmatpush2.bf16.msra.mxu0 %v3189
    %3256 = vmatprep.subr.bf16.mxu0 0
    %3257 = vmatpush2.bf16.msra.mxu0 %v3188
    %3258 = vmatprep.subr.bf16.mxu0 0
    %3259 = vmatpush2.bf16.msra.mxu0 %v3187
    %3260 = vmatprep.subr.bf16.mxu0 0
    %3261 = vmatpush2.bf16.msra.mxu0 %v3186
    %3262 = vmatprep.subr.bf16.mxu0 0
    %3263 = vmatpush2.bf16.msra.mxu0 %v3185
    %3264 = vmatprep.subr.bf16.mxu0 0
    %3265 = vmatpush2.bf16.msra.mxu0 %v3184
    %3266 = vmatprep.subr.bf16.mxu0 0
    %3267 = vmatpush2.bf16.msra.mxu0 %v3183
    %3268 = vmatprep.subr.bf16.mxu0 0
    %3269 = vmatpush2.bf16.msra.mxu0 %v3182
    %3270 = vmatprep.mubr.bf16.mxu0 %v2929
    %3271 = vmatmul.mubr.bf16.gmra.mxu0 %v2916
    %v3272 = vpop.f32.mrf.mxu0
    %v3273 = vadd.f32 %v3044, %v3272
    %v3274 = vpop.f32.mrf.mxu0
    %v3275 = vpop.f32.mrf.mxu0
    %v3276 = vadd.f32 %v3044, %v3275
    %v3277 = vpop.f32.mrf.mxu0
    %3278 = vmatprep.mubr.bf16.mxu0 %v2933
    %3279 = vmatmul.mubr.bf16.gmra.mxu0 %v2919
    %v3280 = vpop.f32.mrf.mxu0
    %v3281 = vadd.f32 %v3044, %v3280
    %v3282 = vpop.f32.mrf.mxu0
    %v3283 = vpop.f32.mrf.mxu0
    %v3284 = vadd.f32 %v3044, %v3283
    %v3285 = vpop.f32.mrf.mxu0
    %3286 = vmatprep.mubr.bf16.mxu0 %v2937
    %3287 = vmatmul.mubr.bf16.gmra.mxu0 %v2922
    %v3288 = vpop.f32.mrf.mxu0
    %v3289 = vadd.f32 %v3044, %v3288
    %v3290 = vpop.f32.mrf.mxu0
    %v3291 = vpop.f32.mrf.mxu0
    %v3292 = vadd.f32 %v3044, %v3291
    %v3293 = vpop.f32.mrf.mxu0
    %3294 = vmatprep.mubr.bf16.mxu0 %v2941
    %3295 = vmatmul.mubr.bf16.gmra.mxu0 %v2925
    %v3296 = vpop.f32.mrf.mxu0
    %v3297 = vadd.f32 %v3044, %v3296
    %v3298 = vpop.f32.mrf.mxu0
    %v3299 = vpop.f32.mrf.mxu0
    %v3300 = vadd.f32 %v3044, %v3299
    %v3301 = vpop.f32.mrf.mxu0
    %3302 = vdwg.mxu0
    %3303 = vmatprep.subr.bf16.mxu0 0
    %3304 = vmatpush1.bf16.msra.mxu0 %v3197
    %3305 = vmatprep.subr.bf16.mxu0 0
    %3306 = vmatpush1.bf16.msra.mxu0 %v3196
    %3307 = vmatprep.subr.bf16.mxu0 0
    %3308 = vmatpush1.bf16.msra.mxu0 %v3195
    %3309 = vmatprep.subr.bf16.mxu0 0
    %3310 = vmatpush1.bf16.msra.mxu0 %v3194
    %3311 = vmatprep.subr.bf16.mxu0 0
    %3312 = vmatpush1.bf16.msra.mxu0 %v3193
    %3313 = vmatprep.subr.bf16.mxu0 0
    %3314 = vmatpush1.bf16.msra.mxu0 %v3192
    %3315 = vmatprep.subr.bf16.mxu0 0
    %3316 = vmatpush1.bf16.msra.mxu0 %v3191
    %3317 = vmatprep.subr.bf16.mxu0 0
    %3318 = vmatpush1.bf16.msra.mxu0 %v3190
    %3319 = vmatprep.subr.bf16.mxu0 0
    %3320 = vmatpush2.bf16.msra.mxu0 %v3205
    %3321 = vmatprep.subr.bf16.mxu0 0
    %3322 = vmatpush2.bf16.msra.mxu0 %v3204
    %3323 = vmatprep.subr.bf16.mxu0 0
    %3324 = vmatpush2.bf16.msra.mxu0 %v3203
    %3325 = vmatprep.subr.bf16.mxu0 0
    %3326 = vmatpush2.bf16.msra.mxu0 %v3202
    %3327 = vmatprep.subr.bf16.mxu0 0
    %3328 = vmatpush2.bf16.msra.mxu0 %v3201
    %3329 = vmatprep.subr.bf16.mxu0 0
    %3330 = vmatpush2.bf16.msra.mxu0 %v3200
    %3331 = vmatprep.subr.bf16.mxu0 0
    %3332 = vmatpush2.bf16.msra.mxu0 %v3199
    %3333 = vmatprep.subr.bf16.mxu0 0
    %3334 = vmatpush2.bf16.msra.mxu0 %v3198
    %3335 = vmatprep.mubr.bf16.mxu0 %v2961
    %3336 = vmatmul.mubr.bf16.gmra.mxu0 %v2945
    %v3337 = vpop.f32.mrf.mxu0
    %v3338 = vadd.f32 %v3273, %v3337
    %v3339 = vpop.f32.mrf.mxu0
    %v3340 = vpop.f32.mrf.mxu0
    %v3341 = vadd.f32 %v3276, %v3340
    %v3342 = vpop.f32.mrf.mxu0
    %3343 = vmatprep.mubr.bf16.mxu0 %v2965
    %3344 = vmatmul.mubr.bf16.gmra.mxu0 %v2949
    %v3345 = vpop.f32.mrf.mxu0
    %v3346 = vadd.f32 %v3281, %v3345
    %v3347 = vpop.f32.mrf.mxu0
    %v3348 = vpop.f32.mrf.mxu0
    %v3349 = vadd.f32 %v3284, %v3348
    %v3350 = vpop.f32.mrf.mxu0
    %3351 = vmatprep.mubr.bf16.mxu0 %v2969
    %3352 = vmatmul.mubr.bf16.gmra.mxu0 %v2953
    %v3353 = vpop.f32.mrf.mxu0
    %v3354 = vadd.f32 %v3289, %v3353
    %v3355 = vpop.f32.mrf.mxu0
    %v3356 = vpop.f32.mrf.mxu0
    %v3357 = vadd.f32 %v3292, %v3356
    %v3358 = vpop.f32.mrf.mxu0
    %3359 = vmatprep.mubr.bf16.mxu0 %v2973
    %3360 = vmatmul.mubr.bf16.gmra.mxu0 %v2957
    %v3361 = vpop.f32.mrf.mxu0
    %v3362 = vadd.f32 %v3297, %v3361
    %v3363 = vpop.f32.mrf.mxu0
    %v3364 = vpop.f32.mrf.mxu0
    %v3365 = vadd.f32 %v3300, %v3364
    %v3366 = vpop.f32.mrf.mxu0
    %3367 = vdwg.mxu0
    %v3368 = vmax.f32 %v3338, 0.0
    %v3369 = vmax.f32 %v3341, 0.0
    %v3370 = vmax.f32 %v3346, 0.0
    %v3371 = vmax.f32 %v3349, 0.0
    %v3372 = vmax.f32 %v3354, 0.0
    %v3373 = vmax.f32 %v3357, 0.0
    %v3374 = vmax.f32 %v3362, 0.0
    %v3375 = vmax.f32 %v3365, 0.0
    %v3376 = vlaneseq
    %v3377 = vshrl.u32 %v3376, 7
    %v3378 = vadd.s32 %v3377, 8
    %v3379 = vadd.s32 %v3377, 16
    %v3380 = vadd.s32 %v3377, 24
    %vm3381 = vcmp.lt.s32.totalorder %v3377, 19
    %vm3382 = vcmp.lt.s32.totalorder %v3378, 19
    %vm3383 = vcmp.lt.s32.totalorder %v3379, 19
    %vm3384 = vcmp.lt.s32.totalorder %v3380, 19
    %v3385 = vsel %vm3381, 1, 0
    %v3386 = vsel %vm3382, 1, 0
    %v3387 = vsel %vm3383, 1, 0
    %v3388 = vsel %vm3384, 1, 0
    %v3389 = vcvt.s32.f32 %v3385
    %v3390 = vcvt.s32.f32 %v3386
    %v3391 = vcvt.s32.f32 %v3387
    %v3392 = vcvt.s32.f32 %v3388
    %v3393 = vmul.f32 %v3368, %v3389
    %v3394 = vmul.f32 %v3369, %v3390
    %v3395 = vmul.f32 %v3370, %v3391
    %v3396 = vmul.f32 %v3371, %v3392
    %v3397 = vmul.f32 %v3372, %v3389
    %v3398 = vmul.f32 %v3373, %v3390
    %v3399 = vmul.f32 %v3374, %v3391
    %v3400 = vmul.f32 %v3375, %v3392
    %v3401 = vmax.f32 %v3393, %v3395
    %v3402 = vmax.f32 %v3394, %v3396
    %v3403 = vmax.f32 %v3401, %v3402
    %v3404 = vrot.slane %v3403, 4
    %v3405 = vmax.f32 %v3403, %v3404
    %v3406 = vrot.slane %v3405, 2
    %v3407 = vmax.f32 %v3405, %v3406
    %v3408 = vrot.slane %v3407, 1
    %v3409 = vmax.f32 %v3407, %v3408
    %v3410 = vmax.f32 %v3397, %v3399
    %v3411 = vmax.f32 %v3398, %v3400
    %v3412 = vmax.f32 %v3410, %v3411
    %v3413 = vrot.slane %v3412, 4
    %v3414 = vmax.f32 %v3412, %v3413
    %v3415 = vrot.slane %v3414, 2
    %v3416 = vmax.f32 %v3414, %v3415
    %v3417 = vrot.slane %v3416, 1
    %v3418 = vmax.f32 %v3416, %v3417
    %vm3421 = vcmask 1041409
    %v3422 = vsel %vm3421, %v3418, %v3409
    %3424 = vst [vmem:[#allocation2] sm:$0x3] %v3422
    // Predicated region
    $region30: #{base_model_forward.1} parent=1 // pred_check
      _
    $region31: #{base_model_forward.1} parent=1 // pred_check_branch
      %3426 = sbr.rel (0) target = $region33
    $region32: #{base_model_forward.1} parent=1 // pred_region
      %s3428 = ssub.s32 32, 32
      %3429 = vsyncadd [#allocation3], %s3428
      %s3431 = sshll.u32 [#allocation2], 4
      %s3432 = int_to_ptr.vmem [resolvable:$true] %s3431
      %3434 = dma.vmem_to_hbm [thread:$0]  %s3432, 32, %s7, [#allocation3]
    $region33: #{base_model_forward.1} parent=1 // pred_fallthru
      _
    // Predicated region
    $region34: #{base_model_forward.1} parent=1 // pred_check
      _
    $region35: #{base_model_forward.1} parent=1 // pred_check_branch
      %3436 = sbr.rel (0) target = $region37
    $region36: #{base_model_forward.1} parent=1 // pred_region
      %3437 = dma.done [#allocation3], 32
    $region37: #{base_model_forward.1} parent=1 // pred_fallthru
      _
    %3438 = vsyncpa [#allocation3], 1

</llo_original>
